<compile_context>
chip_gen: v7x
topology: tpu7x:2x2x1
jax: 0.10.0
libtpu: 0.0.40
codegen_flags: <defaults>
</compile_context>

<pallas_src>
import functools

import jax
import jax.numpy as jnp
import numpy as np
from jax.experimental import pallas as pl
from jax.experimental.pallas import tpu as pltpu

_LANE = 128


def _round_up(x, m):
    return (x + m - 1) // m * m


# ----------------------------------------------------------------------------
# Fused whole-stack TCN Pallas kernel
# ----------------------------------------------------------------------------
def _make_tcn_kernel(*, TL, K, levels, n_lt, L_true, Lp):
    """levels: per-level static metadata dicts:
         dilation, p, cin_p, cout_p, identity (bool).
    Grid = (B, n_lt). Each grid step consumes one (TL, cin0_p) input tile and
    runs the whole residual stack on it; only the fused temporal mean is
    written to HBM (on the last L tile of each batch element)."""

    def kernel(*refs):
        it = iter(refs)
        x_ref = next(it)                               # (1, TL, cin0_p)  bf16
        wrefs = []
        for lm in levels:
            w1 = next(it)                              # (K*cin_p, cout_p) bf16
            b1 = next(it)                              # (1, cout_p)       f32
            w2 = next(it)                              # (K*cout_p, cout_p) bf16
            b2 = next(it)                              # (1, cout_p)       f32
            if lm["identity"]:
                wd = bd = None
            else:
                wd = next(it)                          # (cin_p, cout_p)   bf16
                bd = next(it)                          # (1, cout_p)       f32
            wrefs.append((w1, b1, w2, b2, wd, bd))
        out_ref = next(it)                             # (1, 1, cout_last_p) f32
        bufs = [(next(it), next(it)) for _ in levels]  # (p+TL, c) bf16 each
        sum_ref = next(it)                             # (1, cout_last_p) f32

        lt = pl.program_id(1)

        @pl.when(lt == 0)
        def _init():
            # Causal left padding: zero history at the start of every sequence.
            for (xbuf, hbuf), lm in zip(bufs, levels):
                p = lm["p"]
                xbuf[0:p, :] = jnp.zeros((p, lm["cin_p"]), xbuf.dtype)
                hbuf[0:p, :] = jnp.zeros((p, lm["cout_p"]), hbuf.dtype)
            sum_ref[...] = jnp.zeros_like(sum_ref)

        # TODO(synk): the (TL, cin0_p) copy into xbuf could be avoided with a
        # memory_space=pl.ANY input + make_async_copy straight into xbuf[p:].
        cur = x_ref[0]                                 # (TL, cin0_p) bf16
        y = None
        for i, lm in enumerate(levels):
            d, p = lm["dilation"], lm["p"]
            w1, b1, w2, b2, wd, bd = wrefs[i]
            xbuf, hbuf = bufs[i]

            xbuf[p:p + TL, :] = cur

            # ---- conv1 (+bias, ReLU): im2col the K dilated taps along lanes
            # into one MXU contraction; h stays in VMEM only. -----------------
            xcat = jnp.concatenate(
                [xbuf[j * d:j * d + TL, :] for j in range(K)], axis=-1)
            h = jnp.maximum(
                jnp.dot(xcat, w1[...], preferred_element_type=jnp.float32)
                + b1[...], 0.0)
            hbuf[p:p + TL, :] = h.astype(hbuf.dtype)

            # ---- conv2 (+bias, ReLU) ----------------------------------------
            hcat = jnp.concatenate(
                [hbuf[j * d:j * d + TL, :] for j in range(K)], axis=-1)
            o = jnp.maximum(
                jnp.dot(hcat, w2[...], preferred_element_type=jnp.float32)
                + b2[...], 0.0)

            # ---- residual branch (+1x1 downsample) + final ReLU -------------
            if lm["identity"]:
                res = cur.astype(jnp.float32)
            else:
                res = (jnp.dot(cur, wd[...], preferred_element_type=jnp.float32)
                       + bd[...])
            y = jnp.maximum(o + res, 0.0)              # (TL, cout_p) f32

            # ---- roll causal history forward for the next L tile.
            # Load into a value first (JAX value semantics) so overlapping
            # src/dst ranges (p > TL at deep levels) cannot alias. -------------
            if n_lt > 1:
                x_hist = xbuf[TL:TL + p, :]
                h_hist = hbuf[TL:TL + p, :]
                xbuf[0:p, :] = x_hist
                hbuf[0:p, :] = h_hist

            cur = y.astype(jnp.bfloat16)               # next level's input

        # ---- fused temporal mean: running f32 sum in VMEM; the last level's
        # activation never touches HBM. Tail mask only on the last tile. -------
        if Lp == L_true:
            sum_ref[...] += jnp.sum(y, axis=0, keepdims=True)
        else:
            @pl.when(lt < n_lt - 1)
            def _acc_full():
                sum_ref[...] += jnp.sum(y, axis=0, keepdims=True)

            @pl.when(lt == n_lt - 1)
            def _acc_masked():
                rows = lt * TL + jax.lax.broadcasted_iota(jnp.int32, (TL, 1), 0)
                sum_ref[...] += jnp.sum(jnp.where(rows < L_true, y, 0.0),
                                        axis=0, keepdims=True)

        @pl.when(lt == n_lt - 1)
        def _finalize():
            out_ref[0] = (sum_ref[...] * (1.0 / L_true)).astype(out_ref.dtype)

    return kernel


def _vmem_estimate_bytes(levels, TL, K, cin0_p, cout_last_p):
    act = 2                                            # bf16 itemsize
    est = 2 * TL * cin0_p * act                        # double-buffered input tile
    est += 2 * cout_last_p * 4                         # output block
    est += cout_last_p * 4                             # mean accumulator
    for lm in levels:
        p, cin_p, cout_p = lm["p"], lm["cin_p"], lm["cout_p"]
        est += (p + TL) * (cin_p + cout_p) * act       # history scratches
        w = (K * cin_p * cout_p + K * cout_p * cout_p) * act + 2 * cout_p * 4
        if not lm["identity"]:
            w += cin_p * cout_p * act + cout_p * 4
        est += 2 * w                                   # weights double-buffered
    return est


def tcn_forward_pallas(x_ncl, prepared, *, kernel_size, out_channels,
                       tl_target=512):
    """x_ncl: (B, Cin, L) float.  prepared: list of per-level dicts of arrays
    (w1, b1, w2, b2, wd, bd) from prepare_tcn_weights.  Returns (B, C_last)."""
    # TODO(synk): Dropout layers are identity here (inference / eval semantics).
    B, Cin, L = x_ncl.shape
    K = kernel_size
    assert K >= 2, "kernel_size must be >= 2"

    # Static per-level metadata derived from array shapes (trace-time safe).
    levels = []
    for i, lm in enumerate(prepared):
        cout_p = lm["w1"].shape[1]
        cin_p = lm["w1"].shape[0] // K
        d = 2 ** i
        levels.append(dict(dilation=d, p=(K - 1) * d, cin_p=cin_p,
                           cout_p=cout_p, identity=lm["wd"] is None))
    cin0_p = levels[0]["cin_p"]
    cout_last_p = levels[-1]["cout_p"]

    # Balanced L tiling: minimizes padded-tail DMA / MXU / VPU work.
    n_lt = -(-L // tl_target)
    TL = _round_up(-(-L // n_lt), 8)
    Lp = n_lt * TL

    # One-time layout change: NCL -> (B, Lp, cin0_p), bf16, lane/tile padded.
    x = jnp.transpose(x_ncl, (0, 2, 1))
    x = jnp.pad(x, ((0, 0), (0, Lp - L), (0, cin0_p - Cin))).astype(jnp.bfloat16)

    in_specs = [pl.BlockSpec((1, TL, cin0_p), lambda b, lt: (b, lt, 0))]
    args = [x]
    scratch = []
    flops = 0
    for lm, meta in zip(prepared, levels):
        cin_p, cout_p, p = meta["cin_p"], meta["cout_p"], meta["p"]
        # Weight index_maps are grid-invariant -> fetched once, never re-DMA'd.
        # (pipeline_mode=pl.Buffered(1) would also halve their VMEM footprint.)
        in_specs += [
            pl.BlockSpec((K * cin_p, cout_p), lambda b, lt: (0, 0)),
            pl.BlockSpec((1, cout_p), lambda b, lt: (0, 0)),
            pl.BlockSpec((K * cout_p, cout_p), lambda b, lt: (0, 0)),
            pl.BlockSpec((1, cout_p), lambda b, lt: (0, 0)),
        ]
        args += [lm["w1"], lm["b1"], lm["w2"], lm["b2"]]
        if not meta["identity"]:
            in_specs += [
                pl.BlockSpec((cin_p, cout_p), lambda b, lt: (0, 0)),
                pl.BlockSpec((1, cout_p), lambda b, lt: (0, 0)),
            ]
            args += [lm["wd"], lm["bd"]]
        scratch += [pltpu.VMEM((p + TL, cin_p), jnp.bfloat16),
                    pltpu.VMEM((p + TL, cout_p), jnp.bfloat16)]
        flops += 2 * B * Lp * K * cin_p * cout_p
        flops += 2 * B * Lp * K * cout_p * cout_p
        if not meta["identity"]:
            flops += 2 * B * Lp * cin_p * cout_p
    scratch.append(pltpu.VMEM((1, cout_last_p), jnp.float32))

    out_shape = jax.ShapeDtypeStruct((B, 1, cout_last_p), jnp.float32)
    out_spec = pl.BlockSpec((1, 1, cout_last_p), lambda b, lt: (b, 0, 0))

    wbytes = sum(int(np.prod(a.shape)) * jnp.dtype(a.dtype).itemsize
                 for a in args[1:])
    bytes_accessed = int(2 * B * Lp * cin0_p + 4 * B * cout_last_p + wbytes)

    kernel = _make_tcn_kernel(TL=TL, K=K, levels=levels, n_lt=n_lt,
                              L_true=L, Lp=Lp)

    compiler_kwargs = dict(dimension_semantics=("parallel", "arbitrary"))
    est = _vmem_estimate_bytes(levels, TL, K, cin0_p, cout_last_p)
    if est > 12 * 1024 * 1024:
        # Production-size channel counts: raise the scoped VMEM budget
        # (v5e default 16 MiB, v6e/v7x 32 MiB) with headroom.
        compiler_kwargs["vmem_limit_bytes"] = int(min(2 * est, 100 * 1024 * 1024))

    out = pl.pallas_call(
        kernel,
        out_shape=out_shape,
        grid=(B, n_lt),
        in_specs=in_specs,
        out_specs=out_spec,
        scratch_shapes=scratch,
        compiler_params=pltpu.CompilerParams(**compiler_kwargs),
        cost_estimate=pl.CostEstimate(flops=int(flops), transcendentals=0,
                                      bytes_accessed=bytes_accessed),
    )(*args)
    return out[:, 0, :out_channels].astype(jnp.float32)


# ----------------------------------------------------------------------------
# One-time parameter preparation (weight_norm, layout, lane padding, bf16 cast)
# ----------------------------------------------------------------------------
def weight_norm_reparam(v, g):
    # PyTorch weight_norm for Conv1d (dim=0): w = g * v / ||v||, norm over (Cin, K).
    norm = jnp.sqrt(jnp.sum(v * v, axis=(1, 2), keepdims=True))
    return g[:, None, None] * v / norm


def prepare_tcn_weights(params, num_inputs, num_channels, kernel_size,
                        dtype=jnp.bfloat16):
    """Hoisted out of the forward: weight_norm reparam, transpose to
    (K, Cin, Cout), zero-pad channels to 128 lanes, concatenate the K dilated
    taps along the contraction axis (-> (K*Cin_p, Cout_p)), cast to bf16.
    Biases stay f32 (added in the f32 accumulator epilogue)."""
    prepared = []
    cin = num_inputs
    K = kernel_size
    for i, pr in enumerate(params):
        cout = num_channels[i]
        cin_p = _round_up(cin, _LANE)
        cout_p = _round_up(cout, _LANE)
        w1 = weight_norm_reparam(pr["v1"], pr["g1"])          # (cout, cin, K)
        w2 = weight_norm_reparam(pr["v2"], pr["g2"])          # (cout, cout, K)
        w1_k = jnp.pad(jnp.transpose(w1, (2, 1, 0)),          # (K, cin_p, cout_p)
                       ((0, 0), (0, cin_p - cin), (0, cout_p - cout)))
        w2_k = jnp.pad(jnp.transpose(w2, (2, 1, 0)),
                       ((0, 0), (0, cout_p - cout), (0, cout_p - cout)))
        w1c = w1_k.reshape(K * cin_p, cout_p).astype(dtype)   # tap j -> rows j*cin_p:
        w2c = w2_k.reshape(K * cout_p, cout_p).astype(dtype)
        b1 = jnp.pad(pr["b1"], (0, cout_p - cout)).reshape(1, cout_p).astype(jnp.float32)
        b2 = jnp.pad(pr["b2"], (0, cout_p - cout)).reshape(1, cout_p).astype(jnp.float32)
        if pr["wd"] is None:
            wd, bd = None, None
        else:
            wd_io = jnp.transpose(pr["wd"][:, :, 0], (1, 0))  # (cin, cout)
            wd = jnp.pad(wd_io, ((0, cin_p - cin), (0, cout_p - cout))).astype(dtype)
            bd = jnp.pad(pr["bd"], (0, cout_p - cout)).reshape(1, cout_p).astype(jnp.float32)
        prepared.append(dict(w1=w1c, b1=b1, w2=w2c, b2=b2, wd=wd, bd=bd))
        cin = cout
    return prepared


def init_tcn_params(key, num_inputs, num_channels, kernel_size):
    params = []
    for i, cout in enumerate(num_channels):
        cin = num_inputs if i == 0 else num_channels[i - 1]
        key, k1, k2, k3, k4, k5, k6 = jax.random.split(key, 7)
        v1 = 0.01 * jax.random.normal(k1, (cout, cin, kernel_size), jnp.float32)
        b1 = 0.05 * jax.random.normal(k2, (cout,), jnp.float32)
        v2 = 0.01 * jax.random.normal(k3, (cout, cout, kernel_size), jnp.float32)
        b2 = 0.05 * jax.random.normal(k4, (cout,), jnp.float32)
        g1 = jnp.sqrt(jnp.sum(v1 * v1, axis=(1, 2)))   # weight_norm init: g = ||v||
        g2 = jnp.sqrt(jnp.sum(v2 * v2, axis=(1, 2)))
        if cin != cout:
            wd = 0.01 * jax.random.normal(k5, (cout, cin, 1), jnp.float32)
            bd = 0.05 * jax.random.normal(k6, (cout,), jnp.float32)
        else:
            wd, bd = None, None
        params.append(dict(v1=v1, g1=g1, b1=b1, v2=v2, g2=g2, b2=b2, wd=wd, bd=bd))
    return params


# ----------------------------------------------------------------------------
# Pure-JAX f32 reference (semantics check)
# ----------------------------------------------------------------------------
def _conv1d_ref(x_ncl, w_oik, b, padding, dilation):
    y = jax.lax.conv_general_dilated(
        x_ncl, w_oik, window_strides=(1,), padding=[(padding, padding)],
        rhs_dilation=(dilation,), dimension_numbers=("NCH", "OIH", "NCH"))
    y = y + b[None, :, None]
    if padding > 0:
        y = y[:, :, :-padding]                    # Chomp1d
    return y


def tcn_forward_ref(x_ncl, params, kernel_size):
    x = x_ncl
    for i, p in enumerate(params):
        d = 2 ** i
        pad = (kernel_size - 1) * d
        w1 = weight_norm_reparam(p["v1"], p["g1"])
        w2 = weight_norm_reparam(p["v2"], p["g2"])
        h = jax.nn.relu(_conv1d_ref(x, w1, p["b1"], pad, d))
        o = jax.nn.relu(_conv1d_ref(h, w2, p["b2"], pad, d))
        res = x if p["wd"] is None else _conv1d_ref(x, p["wd"], p["bd"], 0, 1)
        x = jax.nn.relu(o + res)
    return jnp.mean(x, axis=2)


# ----------------------------------------------------------------------------
if __name__ == "__main__":
    B, num_inputs, seq_len = 2, 4, 16
    num_channels = [8, 8]      # level 0: 1x1 downsample (4 != 8); level 1: identity residual
    kernel_size = 2
    dropout = 0.2              # identity at inference

    key = jax.random.PRNGKey(0)
    key, xk = jax.random.split(key)
    x = jax.random.normal(xk, (B, num_inputs, seq_len), jnp.float32)  # PyTorch NCL
    params = init_tcn_params(key, num_inputs, num_channels, kernel_size)

    # Weight prep (weight_norm, transposes, K-tap concat, lane padding, bf16)
    # hoisted out of the hot path.
    prepared = prepare_tcn_weights(params, num_inputs, num_channels, kernel_size)

    fwd = jax.jit(functools.partial(tcn_forward_pallas,
                                    kernel_size=kernel_size,
                                    out_channels=num_channels[-1]))
    out = jax.block_until_ready(fwd(x, prepared))   # (B, num_channels[-1])

    ref = tcn_forward_ref(x, params, kernel_size)
    # bf16 datapath (f32 accumulation): slightly looser tolerance than pure f32.
    np.testing.assert_allclose(np.asarray(out), np.asarray(ref),
                               rtol=2e-2, atol=5e-3)
    print("KERNEL_OK")
</pallas_src>

<mosaic_0001>
module attributes {stable_mosaic.version = 11 : i64} {
  func.func @kernel(%arg0: i32, %arg1: i32, %arg2: memref<1x16x128xbf16, #tpu.memory_space<vmem>>, %arg3: memref<256x128xbf16, #tpu.memory_space<vmem>>, %arg4: memref<1x128xf32, #tpu.memory_space<vmem>>, %arg5: memref<256x128xbf16, #tpu.memory_space<vmem>>, %arg6: memref<1x128xf32, #tpu.memory_space<vmem>>, %arg7: memref<128x128xbf16, #tpu.memory_space<vmem>>, %arg8: memref<1x128xf32, #tpu.memory_space<vmem>>, %arg9: memref<256x128xbf16, #tpu.memory_space<vmem>>, %arg10: memref<1x128xf32, #tpu.memory_space<vmem>>, %arg11: memref<256x128xbf16, #tpu.memory_space<vmem>>, %arg12: memref<1x128xf32, #tpu.memory_space<vmem>>, %arg13: memref<1x1x128xf32, #tpu.memory_space<vmem>>, %arg14: memref<17x128xbf16, #tpu.memory_space<vmem>>, %arg15: memref<17x128xbf16, #tpu.memory_space<vmem>>, %arg16: memref<18x128xbf16, #tpu.memory_space<vmem>>, %arg17: memref<18x128xbf16, #tpu.memory_space<vmem>>, %arg18: memref<1x128xf32, #tpu.memory_space<vmem>>) attributes {dimension_semantics = [#tpu.dimension_semantics<parallel>, #tpu.dimension_semantics<arbitrary>], iteration_bounds = array<i64: 2, 1>, scalar_prefetch = 0 : i64, scratch_operands = 5 : i64, tpu.core_type = #tpu.core_type<tc>, window_params = [{transform_indices = @transform_0, window_bounds = array<i64: 1, 16, 128>}, {pipeline_mode = #tpu.pipeline_mode<synchronous>, transform_indices = @transform_1, window_bounds = array<i64: 256, 128>}, {pipeline_mode = #tpu.pipeline_mode<synchronous>, transform_indices = @transform_2, window_bounds = array<i64: 1, 128>}, {pipeline_mode = #tpu.pipeline_mode<synchronous>, transform_indices = @transform_3, window_bounds = array<i64: 256, 128>}, {pipeline_mode = #tpu.pipeline_mode<synchronous>, transform_indices = @transform_4, window_bounds = array<i64: 1, 128>}, {pipeline_mode = #tpu.pipeline_mode<synchronous>, transform_indices = @transform_5, window_bounds = array<i64: 128, 128>}, {pipeline_mode = #tpu.pipeline_mode<synchronous>, transform_indices = @transform_6, window_bounds = array<i64: 1, 128>}, {pipeline_mode = #tpu.pipeline_mode<synchronous>, transform_indices = @transform_7, window_bounds = array<i64: 256, 128>}, {pipeline_mode = #tpu.pipeline_mode<synchronous>, transform_indices = @transform_8, window_bounds = array<i64: 1, 128>}, {pipeline_mode = #tpu.pipeline_mode<synchronous>, transform_indices = @transform_9, window_bounds = array<i64: 256, 128>}, {pipeline_mode = #tpu.pipeline_mode<synchronous>, transform_indices = @transform_10, window_bounds = array<i64: 1, 128>}, {transform_indices = @transform_11, window_bounds = array<i64: 1, 1, 128>}]} {
    %c0_i32 = arith.constant 0 : i32
    %0 = arith.cmpi eq, %arg1, %c0_i32 : i32
    %1 = arith.extui %0 : i1 to i32
    %c0_i32_0 = arith.constant 0 : i32
    %2 = arith.cmpi ne, %1, %c0_i32_0 : i32
    scf.if %2 {
      %cst_62 = arith.constant 0.000000e+00 : bf16
      %72 = vector.broadcast %cst_62 : bf16 to vector<1x128xbf16>
      %c0_63 = arith.constant 0 : index
      %c0_64 = arith.constant 0 : index
      %73 = vector.load %arg14[%c0_63, %c0_64] : memref<17x128xbf16, #tpu.memory_space<vmem>>, vector<1x128xbf16>
      tpu.vector_store %arg14[%c0_63, %c0_64], %72 {strides = array<i32>} : memref<17x128xbf16, #tpu.memory_space<vmem>>, vector<1x128xbf16>,
      %cst_65 = arith.constant 0.000000e+00 : bf16
      %74 = vector.broadcast %cst_65 : bf16 to vector<1x128xbf16>
      %c0_66 = arith.constant 0 : index
      %c0_67 = arith.constant 0 : index
      %75 = vector.load %arg15[%c0_66, %c0_67] : memref<17x128xbf16, #tpu.memory_space<vmem>>, vector<1x128xbf16>
      tpu.vector_store %arg15[%c0_66, %c0_67], %74 {strides = array<i32>} : memref<17x128xbf16, #tpu.memory_space<vmem>>, vector<1x128xbf16>,
      %cst_68 = arith.constant 0.000000e+00 : bf16
      %76 = vector.broadcast %cst_68 : bf16 to vector<2x128xbf16>
      %c0_69 = arith.constant 0 : index
      %c0_70 = arith.constant 0 : index
      %77 = vector.load %arg16[%c0_69, %c0_70] : memref<18x128xbf16, #tpu.memory_space<vmem>>, vector<2x128xbf16>
      tpu.vector_store %arg16[%c0_69, %c0_70], %76 {strides = array<i32>} : memref<18x128xbf16, #tpu.memory_space<vmem>>, vector<2x128xbf16>,
      %cst_71 = arith.constant 0.000000e+00 : bf16
      %78 = vector.broadcast %cst_71 : bf16 to vector<2x128xbf16>
      %c0_72 = arith.constant 0 : index
      %c0_73 = arith.constant 0 : index
      %79 = vector.load %arg17[%c0_72, %c0_73] : memref<18x128xbf16, #tpu.memory_space<vmem>>, vector<2x128xbf16>
      tpu.vector_store %arg17[%c0_72, %c0_73], %78 {strides = array<i32>} : memref<18x128xbf16, #tpu.memory_space<vmem>>, vector<2x128xbf16>,
      %cst_74 = arith.constant 0.000000e+00 : f32
      %80 = vector.broadcast %cst_74 : f32 to vector<1x128xf32>
      %c0_75 = arith.constant 0 : index
      %c0_76 = arith.constant 0 : index
      %81 = vector.load %arg18[%c0_75, %c0_76] : memref<1x128xf32, #tpu.memory_space<vmem>>, vector<1x128xf32>
      tpu.vector_store %arg18[%c0_75, %c0_76], %80 {strides = array<i32>} : memref<1x128xf32, #tpu.memory_space<vmem>>, vector<1x128xf32>,
    } else {
    }
    %c0 = arith.constant 0 : index
    %c0_1 = arith.constant 0 : index
    %c0_2 = arith.constant 0 : index
    %3 = vector.load %arg2[%c0, %c0_1, %c0_2] : memref<1x16x128xbf16, #tpu.memory_space<vmem>>, vector<1x16x128xbf16>
    %4 = vector.shape_cast %3 : vector<1x16x128xbf16> to vector<16x128xbf16>
    %c1 = arith.constant 1 : index
    %c0_3 = arith.constant 0 : index
    %5 = vector.load %arg14[%c1, %c0_3] : memref<17x128xbf16, #tpu.memory_space<vmem>>, vector<16x128xbf16>
    tpu.vector_store %arg14[%c1, %c0_3], %4 {strides = array<i32>} : memref<17x128xbf16, #tpu.memory_space<vmem>>, vector<16x128xbf16>,
    %c0_4 = arith.constant 0 : index
    %c0_5 = arith.constant 0 : index
    %6 = vector.load %arg14[%c0_4, %c0_5] : memref<17x128xbf16, #tpu.memory_space<vmem>>, vector<16x128xbf16>
    %c1_6 = arith.constant 1 : index
    %c0_7 = arith.constant 0 : index
    %7 = vector.load %arg14[%c1_6, %c0_7] : memref<17x128xbf16, #tpu.memory_space<vmem>>, vector<16x128xbf16>
    %8 = tpu.concatenate %6, %7 in 1 : vector<16x128xbf16>, vector<16x128xbf16> -> vector<16x256xbf16>
    %c0_8 = arith.constant 0 : index
    %c0_9 = arith.constant 0 : index
    %9 = vector.load %arg3[%c0_8, %c0_9] : memref<256x128xbf16, #tpu.memory_space<vmem>>, vector<256x128xbf16>
    %cst = arith.constant dense<0.000000e+00> : vector<16x128xf32>
    %10 = tpu.matmul %8, %9, %cst {dimension_numbers = #tpu.dot_dimension_numbers<[1], [0], [0], [1], [0, 0, 1, 1], [], []>} : vector<16x256xbf16>, vector<256x128xbf16>, vector<16x128xf32> -> vector<16x128xf32>
    %c0_10 = arith.constant 0 : index
    %c0_11 = arith.constant 0 : index
    %11 = vector.load %arg4[%c0_10, %c0_11] : memref<1x128xf32, #tpu.memory_space<vmem>>, vector<1x128xf32>
    %12 = vector.broadcast %11 : vector<1x128xf32> to vector<16x128xf32>
    %13 = arith.addf %10, %12 : vector<16x128xf32>
    %cst_12 = arith.constant 0.000000e+00 : f32
    %14 = vector.broadcast %cst_12 : f32 to vector<16x128xf32>
    %15 = arith.maximumf %13, %14 : vector<16x128xf32>
    %16 = arith.truncf %15 : vector<16x128xf32> to vector<16x128xbf16>
    %c1_13 = arith.constant 1 : index
    %c0_14 = arith.constant 0 : index
    %17 = vector.load %arg15[%c1_13, %c0_14] : memref<17x128xbf16, #tpu.memory_space<vmem>>, vector<16x128xbf16>
    tpu.vector_store %arg15[%c1_13, %c0_14], %16 {strides = array<i32>} : memref<17x128xbf16, #tpu.memory_space<vmem>>, vector<16x128xbf16>,
    %c0_15 = arith.constant 0 : index
    %c0_16 = arith.constant 0 : index
    %18 = vector.load %arg15[%c0_15, %c0_16] : memref<17x128xbf16, #tpu.memory_space<vmem>>, vector<16x128xbf16>
    %c1_17 = arith.constant 1 : index
    %c0_18 = arith.constant 0 : index
    %19 = vector.load %arg15[%c1_17, %c0_18] : memref<17x128xbf16, #tpu.memory_space<vmem>>, vector<16x128xbf16>
    %20 = tpu.concatenate %18, %19 in 1 : vector<16x128xbf16>, vector<16x128xbf16> -> vector<16x256xbf16>
    %c0_19 = arith.constant 0 : index
    %c0_20 = arith.constant 0 : index
    %21 = vector.load %arg5[%c0_19, %c0_20] : memref<256x128xbf16, #tpu.memory_space<vmem>>, vector<256x128xbf16>
    %cst_21 = arith.constant dense<0.000000e+00> : vector<16x128xf32>
    %22 = tpu.matmul %20, %21, %cst_21 {dimension_numbers = #tpu.dot_dimension_numbers<[1], [0], [0], [1], [0, 0, 1, 1], [], []>} : vector<16x256xbf16>, vector<256x128xbf16>, vector<16x128xf32> -> vector<16x128xf32>
    %c0_22 = arith.constant 0 : index
    %c0_23 = arith.constant 0 : index
    %23 = vector.load %arg6[%c0_22, %c0_23] : memref<1x128xf32, #tpu.memory_space<vmem>>, vector<1x128xf32>
    %24 = vector.broadcast %23 : vector<1x128xf32> to vector<16x128xf32>
    %25 = arith.addf %22, %24 : vector<16x128xf32>
    %cst_24 = arith.constant 0.000000e+00 : f32
    %26 = vector.broadcast %cst_24 : f32 to vector<16x128xf32>
    %27 = arith.maximumf %25, %26 : vector<16x128xf32>
    %c0_25 = arith.constant 0 : index
    %c0_26 = arith.constant 0 : index
    %28 = vector.load %arg7[%c0_25, %c0_26] : memref<128x128xbf16, #tpu.memory_space<vmem>>, vector<128x128xbf16>
    %cst_27 = arith.constant dense<0.000000e+00> : vector<16x128xf32>
    %29 = tpu.matmul %4, %28, %cst_27 {dimension_numbers = #tpu.dot_dimension_numbers<[1], [0], [0], [1], [0, 0, 1, 1], [], []>} : vector<16x128xbf16>, vector<128x128xbf16>, vector<16x128xf32> -> vector<16x128xf32>
    %c0_28 = arith.constant 0 : index
    %c0_29 = arith.constant 0 : index
    %30 = vector.load %arg8[%c0_28, %c0_29] : memref<1x128xf32, #tpu.memory_space<vmem>>, vector<1x128xf32>
    %31 = vector.broadcast %30 : vector<1x128xf32> to vector<16x128xf32>
    %32 = arith.addf %29, %31 : vector<16x128xf32>
    %33 = arith.addf %27, %32 : vector<16x128xf32>
    %cst_30 = arith.constant 0.000000e+00 : f32
    %34 = vector.broadcast %cst_30 : f32 to vector<16x128xf32>
    %35 = arith.maximumf %33, %34 : vector<16x128xf32>
    %36 = arith.truncf %35 : vector<16x128xf32> to vector<16x128xbf16>
    %c2 = arith.constant 2 : index
    %c0_31 = arith.constant 0 : index
    %37 = vector.load %arg16[%c2, %c0_31] : memref<18x128xbf16, #tpu.memory_space<vmem>>, vector<16x128xbf16>
    tpu.vector_store %arg16[%c2, %c0_31], %36 {strides = array<i32>} : memref<18x128xbf16, #tpu.memory_space<vmem>>, vector<16x128xbf16>,
    %c0_32 = arith.constant 0 : index
    %c0_33 = arith.constant 0 : index
    %38 = vector.load %arg16[%c0_32, %c0_33] : memref<18x128xbf16, #tpu.memory_space<vmem>>, vector<16x128xbf16>
    %c2_34 = arith.constant 2 : index
    %c0_35 = arith.constant 0 : index
    %39 = vector.load %arg16[%c2_34, %c0_35] : memref<18x128xbf16, #tpu.memory_space<vmem>>, vector<16x128xbf16>
    %40 = tpu.concatenate %38, %39 in 1 : vector<16x128xbf16>, vector<16x128xbf16> -> vector<16x256xbf16>
    %c0_36 = arith.constant 0 : index
    %c0_37 = arith.constant 0 : index
    %41 = vector.load %arg9[%c0_36, %c0_37] : memref<256x128xbf16, #tpu.memory_space<vmem>>, vector<256x128xbf16>
    %cst_38 = arith.constant dense<0.000000e+00> : vector<16x128xf32>
    %42 = tpu.matmul %40, %41, %cst_38 {dimension_numbers = #tpu.dot_dimension_numbers<[1], [0], [0], [1], [0, 0, 1, 1], [], []>} : vector<16x256xbf16>, vector<256x128xbf16>, vector<16x128xf32> -> vector<16x128xf32>
    %c0_39 = arith.constant 0 : index
    %c0_40 = arith.constant 0 : index
    %43 = vector.load %arg10[%c0_39, %c0_40] : memref<1x128xf32, #tpu.memory_space<vmem>>, vector<1x128xf32>
    %44 = vector.broadcast %43 : vector<1x128xf32> to vector<16x128xf32>
    %45 = arith.addf %42, %44 : vector<16x128xf32>
    %cst_41 = arith.constant 0.000000e+00 : f32
    %46 = vector.broadcast %cst_41 : f32 to vector<16x128xf32>
    %47 = arith.maximumf %45, %46 : vector<16x128xf32>
    %48 = arith.truncf %47 : vector<16x128xf32> to vector<16x128xbf16>
    %c2_42 = arith.constant 2 : index
    %c0_43 = arith.constant 0 : index
    %49 = vector.load %arg17[%c2_42, %c0_43] : memref<18x128xbf16, #tpu.memory_space<vmem>>, vector<16x128xbf16>
    tpu.vector_store %arg17[%c2_42, %c0_43], %48 {strides = array<i32>} : memref<18x128xbf16, #tpu.memory_space<vmem>>, vector<16x128xbf16>,
    %c0_44 = arith.constant 0 : index
    %c0_45 = arith.constant 0 : index
    %50 = vector.load %arg17[%c0_44, %c0_45] : memref<18x128xbf16, #tpu.memory_space<vmem>>, vector<16x128xbf16>
    %c2_46 = arith.constant 2 : index
    %c0_47 = arith.constant 0 : index
    %51 = vector.load %arg17[%c2_46, %c0_47] : memref<18x128xbf16, #tpu.memory_space<vmem>>, vector<16x128xbf16>
    %52 = tpu.concatenate %50, %51 in 1 : vector<16x128xbf16>, vector<16x128xbf16> -> vector<16x256xbf16>
    %c0_48 = arith.constant 0 : index
    %c0_49 = arith.constant 0 : index
    %53 = vector.load %arg11[%c0_48, %c0_49] : memref<256x128xbf16, #tpu.memory_space<vmem>>, vector<256x128xbf16>
    %cst_50 = arith.constant dense<0.000000e+00> : vector<16x128xf32>
    %54 = tpu.matmul %52, %53, %cst_50 {dimension_numbers = #tpu.dot_dimension_numbers<[1], [0], [0], [1], [0, 0, 1, 1], [], []>} : vector<16x256xbf16>, vector<256x128xbf16>, vector<16x128xf32> -> vector<16x128xf32>
    %c0_51 = arith.constant 0 : index
    %c0_52 = arith.constant 0 : index
    %55 = vector.load %arg12[%c0_51, %c0_52] : memref<1x128xf32, #tpu.memory_space<vmem>>, vector<1x128xf32>
    %56 = vector.broadcast %55 : vector<1x128xf32> to vector<16x128xf32>
    %57 = arith.addf %54, %56 : vector<16x128xf32>
    %cst_53 = arith.constant 0.000000e+00 : f32
    %58 = vector.broadcast %cst_53 : f32 to vector<16x128xf32>
    %59 = arith.maximumf %57, %58 : vector<16x128xf32>
    %60 = arith.extf %36 : vector<16x128xbf16> to vector<16x128xf32>
    %61 = arith.addf %59, %60 : vector<16x128xf32>
    %cst_54 = arith.constant 0.000000e+00 : f32
    %62 = vector.broadcast %cst_54 : f32 to vector<16x128xf32>
    %63 = arith.maximumf %61, %62 : vector<16x128xf32>
    %c0_55 = arith.constant 0 : index
    %c0_56 = arith.constant 0 : index
    %64 = vector.load %arg18[%c0_55, %c0_56] : memref<1x128xf32, #tpu.memory_space<vmem>>, vector<1x128xf32>
    %cst_57 = arith.constant dense<0.000000e+00> : vector<128xf32>
    %65 = vector.multi_reduction <add>, %63, %cst_57 [0] : vector<16x128xf32> to vector<128xf32>
    %66 = vector.shape_cast %65 : vector<128xf32> to vector<1x128xf32>
    %67 = arith.addf %64, %66 : vector<1x128xf32>
    %c0_58 = arith.constant 0 : index
    %c0_59 = arith.constant 0 : index
    %68 = vector.load %arg18[%c0_58, %c0_59] : memref<1x128xf32, #tpu.memory_space<vmem>>, vector<1x128xf32>
    tpu.vector_store %arg18[%c0_58, %c0_59], %67 {strides = array<i32>} : memref<1x128xf32, #tpu.memory_space<vmem>>, vector<1x128xf32>,
    %c0_i32_60 = arith.constant 0 : i32
    %69 = arith.cmpi eq, %arg1, %c0_i32_60 : i32
    %70 = arith.extui %69 : i1 to i32
    %c0_i32_61 = arith.constant 0 : i32
    %71 = arith.cmpi ne, %70, %c0_i32_61 : i32
    scf.if %71 {
      %c0_62 = arith.constant 0 : index
      %c0_63 = arith.constant 0 : index
      %72 = vector.load %arg18[%c0_62, %c0_63] : memref<1x128xf32, #tpu.memory_space<vmem>>, vector<1x128xf32>
      %cst_64 = arith.constant 6.250000e-02 : f32
      %73 = vector.broadcast %cst_64 : f32 to vector<1x128xf32>
      %74 = arith.mulf %72, %73 : vector<1x128xf32>
      %c0_65 = arith.constant 0 : index
      %c0_66 = arith.constant 0 : index
      %c0_67 = arith.constant 0 : index
      %75 = vector.load %arg13[%c0_65, %c0_66, %c0_67] : memref<1x1x128xf32, #tpu.memory_space<vmem>>, vector<1x1x128xf32>
      %76 = vector.shape_cast %75 : vector<1x1x128xf32> to vector<1x128xf32>
      %77 = vector.shape_cast %74 : vector<1x128xf32> to vector<1x1x128xf32>
      tpu.vector_store %arg13[%c0_65, %c0_66, %c0_67], %77 {strides = array<i32>} : memref<1x1x128xf32, #tpu.memory_space<vmem>>, vector<1x1x128xf32>,
    } else {
    }
    return
  }
  func.func @transform_0(%arg0: i32, %arg1: i32) -> (i32, i32, i32) {
    %c0_i32 = arith.constant 0 : i32
    %c0_i32_0 = arith.constant 0 : i32
    return %arg0, %arg1, %c0_i32 : i32, i32, i32
  }
  func.func @transform_1(%arg0: i32, %arg1: i32) -> (i32, i32) {
    %c0_i32 = arith.constant 0 : i32
    %c0_i32_0 = arith.constant 0 : i32
    %c0_i32_1 = arith.constant 0 : i32
    return %c0_i32, %c0_i32_0 : i32, i32
  }
  func.func @transform_2(%arg0: i32, %arg1: i32) -> (i32, i32) {
    %c0_i32 = arith.constant 0 : i32
    %c0_i32_0 = arith.constant 0 : i32
    %c0_i32_1 = arith.constant 0 : i32
    return %c0_i32, %c0_i32_0 : i32, i32
  }
  func.func @transform_3(%arg0: i32, %arg1: i32) -> (i32, i32) {
    %c0_i32 = arith.constant 0 : i32
    %c0_i32_0 = arith.constant 0 : i32
    %c0_i32_1 = arith.constant 0 : i32
    return %c0_i32, %c0_i32_0 : i32, i32
  }
  func.func @transform_4(%arg0: i32, %arg1: i32) -> (i32, i32) {
    %c0_i32 = arith.constant 0 : i32
    %c0_i32_0 = arith.constant 0 : i32
    %c0_i32_1 = arith.constant 0 : i32
    return %c0_i32, %c0_i32_0 : i32, i32
  }
  func.func @transform_5(%arg0: i32, %arg1: i32) -> (i32, i32) {
    %c0_i32 = arith.constant 0 : i32
    %c0_i32_0 = arith.constant 0 : i32
    %c0_i32_1 = arith.constant 0 : i32
    return %c0_i32, %c0_i32_0 : i32, i32
  }
  func.func @transform_6(%arg0: i32, %arg1: i32) -> (i32, i32) {
    %c0_i32 = arith.constant 0 : i32
    %c0_i32_0 = arith.constant 0 : i32
    %c0_i32_1 = arith.constant 0 : i32
    return %c0_i32, %c0_i32_0 : i32, i32
  }
  func.func @transform_7(%arg0: i32, %arg1: i32) -> (i32, i32) {
    %c0_i32 = arith.constant 0 : i32
    %c0_i32_0 = arith.constant 0 : i32
    %c0_i32_1 = arith.constant 0 : i32
    return %c0_i32, %c0_i32_0 : i32, i32
  }
  func.func @transform_8(%arg0: i32, %arg1: i32) -> (i32, i32) {
    %c0_i32 = arith.constant 0 : i32
    %c0_i32_0 = arith.constant 0 : i32
    %c0_i32_1 = arith.constant 0 : i32
    return %c0_i32, %c0_i32_0 : i32, i32
  }
  func.func @transform_9(%arg0: i32, %arg1: i32) -> (i32, i32) {
    %c0_i32 = arith.constant 0 : i32
    %c0_i32_0 = arith.constant 0 : i32
    %c0_i32_1 = arith.constant 0 : i32
    return %c0_i32, %c0_i32_0 : i32, i32
  }
  func.func @transform_10(%arg0: i32, %arg1: i32) -> (i32, i32) {
    %c0_i32 = arith.constant 0 : i32
    %c0_i32_0 = arith.constant 0 : i32
    %c0_i32_1 = arith.constant 0 : i32
    return %c0_i32, %c0_i32_0 : i32, i32
  }
  func.func @transform_11(%arg0: i32, %arg1: i32) -> (i32, i32, i32) {
    %c0_i32 = arith.constant 0 : i32
    %c0_i32_0 = arith.constant 0 : i32
    %c0_i32_1 = arith.constant 0 : i32
    return %arg0, %c0_i32, %c0_i32_0 : i32, i32, i32
  }
}

</mosaic_0001>

<llo_original>
// kernel: tcn_forward_pallas.1
$region0: #{tcn_forward_pallas.1}
  #allocation0 [shape = 'u32[]', space=smem, size = 0x4, offset = 0x4, fixed_abs, tag = 'smem constant byte address 0x4 - core index']
  #allocation1 [shape = 'u32[144,128]{1,0:T(1,128)}', space=vmem, size = 0x12000, scoped, tag = 'internal scratch']
  #allocation2 [shape = 'bf16[17,128]{1,0:T(8,128)(2,1)}', space=vmem, size = 0x1800, scoped, tag = 'scratch operand']
  #allocation3 [shape = 'bf16[17,128]{1,0:T(8,128)(2,1)}', space=vmem, size = 0x1800, scoped, tag = 'scratch operand']
  #allocation4 [shape = 'bf16[18,128]{1,0:T(8,128)(2,1)}', space=vmem, size = 0x1800, scoped, tag = 'scratch operand']
  #allocation5 [shape = 'bf16[18,128]{1,0:T(8,128)(2,1)}', space=vmem, size = 0x1800, scoped, tag = 'scratch operand']
  #allocation6 [shape = 'f32[1,128]{1,0:T(1,128)}', space=vmem, size = 0x200, scoped, tag = 'scratch operand']
  %s0 = inlined_call_operand.vmem [shape: bf16[2,16,128], index: 0, kind: input, shape index: {}]
  %s1 = inlined_call_operand.hbm [shape: bf16[256,128], index: 1, kind: input, shape index: {}]
  %s2 = inlined_call_operand.vmem [shape: f32[1,128], index: 2, kind: input, shape index: {}]
  %s3 = inlined_call_operand.hbm [shape: bf16[256,128], index: 3, kind: input, shape index: {}]
  %s4 = inlined_call_operand.vmem [shape: f32[1,128], index: 4, kind: input, shape index: {}]
  %s5 = inlined_call_operand.vmem [shape: bf16[128,128], index: 5, kind: input, shape index: {}]
  %s6 = inlined_call_operand.vmem [shape: f32[1,128], index: 6, kind: input, shape index: {}]
  %s7 = inlined_call_operand.hbm [shape: bf16[256,128], index: 7, kind: input, shape index: {}]
  %s8 = inlined_call_operand.vmem [shape: f32[1,128], index: 8, kind: input, shape index: {}]
  %s9 = inlined_call_operand.hbm [shape: bf16[256,128], index: 9, kind: input, shape index: {}]
  %s10 = inlined_call_operand.vmem [shape: f32[1,128], index: 10, kind: input, shape index: {}]
  %s11 = inlined_call_operand.hbm [shape: f32[2,1,128], index: 11, kind: output, shape index: {}]
  %s12 = sld [smem:[#allocation0]]
  $region101: #{tcn_forward_pallas.1} parent=0
    _
  %s14 = ssub.s32 1, %s12
  %s15 = scalar_select 0, %s14, %s12
  $region1: #{tcn_forward_pallas.1} parent=0
    #allocation7 [shape = 'u8[65536]{0}', space=vmem, size = 0x10000, scoped, tag = 'input window, operand 1, single buffered']
    #allocation8 [shape = 's32[2]{0}', space=sflag, size = 0x8, scoped, tag = 'scoped memory for tcn_forward_pallas.1']
    #allocation9 [shape = 's32[2]{0}', space=sflag, size = 0x8, scoped, tag = 'scoped memory for tcn_forward_pallas.1']
    #allocation10 [shape = 'u8[65536]{0}', space=vmem, size = 0x10000, scoped, tag = 'input window, operand 3, single buffered']
    #allocation11 [shape = 's32[1]{0}', space=sflag, size = 0x4, scoped, tag = 'scoped memory for tcn_forward_pallas.1']
    #allocation12 [shape = 'u8[65536]{0}', space=vmem, size = 0x10000, scoped, tag = 'input window, operand 7, single buffered']
    #allocation13 [shape = 'u8[65536]{0}', space=vmem, size = 0x10000, scoped, tag = 'input window, operand 9, single buffered']
    #allocation14 [shape = 's32[1]{0}', space=sflag, size = 0x4, scoped, tag = 'scoped memory for tcn_forward_pallas.1']
    #allocation15 [shape = 'u8[1024]{0}', space=vmem, size = 0x400, scoped, tag = 'output window, operand 0']
    %16 = vsyncpa [#allocation8], 0
    %17 = vsyncpa [#allocation11], 0
    %18 = vsyncpa [#allocation14], 0
    %19 = vsyncpa [#allocation9], 0
    %s20 = scalar_lea.sflag [#allocation9], 1
    %21 = vsyncpa %s20, 0
    loop: start=0, step=1, limit=4
    $region2: #{tcn_forward_pallas.1} parent=1 // loop_pre_header
      _
    $region3: #{tcn_forward_pallas.1} parent=1 // loop_header
      %s23 = sphi 0, %s27
      %p24 = scmp.ge.s32.totalorder %s23, 4
      %s30 = sphi 0, %s42
      %s31 = sphi 0, %s38
      %s32 = sphi 0, %s30
      %s33 = sphi 0, %s31
      %s34 = sphi 0, %s32
      %s35 = sphi 0, %s33
      %s47 = sphi 0, %s49
      %s50 = sphi 0, %s47
      %s51 = sphi 0, %s50
      %s67 = sphi 0, %s51
      %s71 = sphi 0, %s71
      %s73 = sphi 0, %s71
      %s74 = sphi 0, %s73
      %s88 = sphi 0, %s74
      %s92 = sphi 0, %s92
      %s94 = sphi 0, %s92
      %s95 = sphi 0, %s94
      %s109 = sphi 0, %s95
      %s113 = sphi 0, %s113
      %s115 = sphi 0, %s113
      %s116 = sphi 0, %s115
      %s130 = sphi 0, %s116
      %s134 = sphi 0, %s134
      %s136 = sphi 0, %s134
      %s137 = sphi 0, %s136
      %s151 = sphi 0, %s137
      %s155 = sphi 0, %s155
      %s157 = sphi 0, %s155
      %s158 = sphi 0, %s157
      %s172 = sphi 0, %s158
      %s176 = sphi 0, %s176
      %s178 = sphi 0, %s176
      %s179 = sphi 0, %s178
      %s193 = sphi 0, %s179
      %s197 = sphi 0, %s197
      %s199 = sphi 0, %s197
      %s200 = sphi 0, %s199
      %s214 = sphi 0, %s200
      %s218 = sphi 0, %s218
      %s220 = sphi 0, %s218
      %s221 = sphi 0, %s220
      %s235 = sphi 0, %s221
      %s239 = sphi 0, %s239
      %s241 = sphi 0, %s239
      %s242 = sphi 0, %s241
      %s256 = sphi 0, %s242
      %s260 = sphi 0, %s260
      %s262 = sphi 0, %s260
      %s263 = sphi 0, %s262
      %s277 = sphi 0, %s263
      %s283 = sphi 0, %s285
      %s286 = sphi 0, %s283
      %s287 = sphi 0, %s286
      %s303 = sphi 0, %s287
    $region4: #{tcn_forward_pallas.1} parent=1 // loop_header_branch
      %26 = sbr.rel (%p24) target = $region8
    $region5: #{tcn_forward_pallas.1} parent=1 // loop_body
      %s28 = ssub.s32 %s23, 1
      %s29 = ssub.s32 %s23, 2
      %s36 = sadd.s32 1, %s31
      %p37 = scmp.ge.s32.totalorder %s36, 1
      %s38 = scalar_select %p37, 0, %s36
      %s39 = sadd.s32 1, %s30
      %s40 = scalar_select %p37, %s39, %s30
      %p41 = scmp.ge.s32.totalorder %s40, 2
      %s42 = scalar_select %p41, 0, %s40
      %s43 = ssub.s32 %s30, %s42
      %s44 = ssub.s32 %s31, %s38
      %s45 = sor.u32 %s43, %s44
      %p46 = scmp.eq.s32.totalorder %s45, 0
      %s48 = sadd.s32 %s47, 1
      %s49 = scalar_select %p46, %s47, %s48
      %p52 = pneg %p46
      %p53 = scmp.eq.s32.totalorder %s23, 1
      %p54 = por %p52, %p53
      %p55 = scmp.ne.s32.totalorder %s47, %s50
      %p56 = scmp.eq.s32.totalorder %s23, 0
      %p57 = por %p55, %p56
      %p58 = scmp.ne.s32.totalorder %s47, %s50
      %p59 = scmp.eq.s32.totalorder %s28, 1
      %p60 = por %p58, %p59
      %p61 = scmp.ne.s32.totalorder %s50, %s51
      %p62 = scmp.eq.s32.totalorder %s28, 0
      %p63 = por %p61, %p62
      %p64 = scmp.ne.s32.totalorder %s50, %s51
      %p65 = scmp.eq.s32.totalorder %s29, 1
      %p66 = por %p64, %p65
      %p68 = scmp.ne.s32.totalorder %s51, %s67
      %p69 = scmp.eq.s32.totalorder %s29, 0
      %p70 = por %p68, %p69
      %s72 = sadd.s32 %s71, 1
      %p75 = scmp.eq.s32.totalorder %s23, 1
      %p76 = scmp.ne.s32.totalorder %s71, %s73
      %p77 = scmp.eq.s32.totalorder %s23, 0
      %p78 = por %p76, %p77
      %p79 = scmp.ne.s32.totalorder %s71, %s73
      %p80 = scmp.eq.s32.totalorder %s28, 1
      %p81 = por %p79, %p80
      %p82 = scmp.ne.s32.totalorder %s73, %s74
      %p83 = scmp.eq.s32.totalorder %s28, 0
      %p84 = por %p82, %p83
      %p85 = scmp.ne.s32.totalorder %s73, %s74
      %p86 = scmp.eq.s32.totalorder %s29, 1
      %p87 = por %p85, %p86
      %p89 = scmp.ne.s32.totalorder %s74, %s88
      %p90 = scmp.eq.s32.totalorder %s29, 0
      %p91 = por %p89, %p90
      %s93 = sadd.s32 %s92, 1
      %p96 = scmp.eq.s32.totalorder %s23, 1
      %p97 = scmp.ne.s32.totalorder %s92, %s94
      %p98 = scmp.eq.s32.totalorder %s23, 0
      %p99 = por %p97, %p98
      %p100 = scmp.ne.s32.totalorder %s92, %s94
      %p101 = scmp.eq.s32.totalorder %s28, 1
      %p102 = por %p100, %p101
      %p103 = scmp.ne.s32.totalorder %s94, %s95
      %p104 = scmp.eq.s32.totalorder %s28, 0
      %p105 = por %p103, %p104
      %p106 = scmp.ne.s32.totalorder %s94, %s95
      %p107 = scmp.eq.s32.totalorder %s29, 1
      %p108 = por %p106, %p107
      %p110 = scmp.ne.s32.totalorder %s95, %s109
      %p111 = scmp.eq.s32.totalorder %s29, 0
      %p112 = por %p110, %p111
      %s114 = sadd.s32 %s113, 1
      %p117 = scmp.eq.s32.totalorder %s23, 1
      %p118 = scmp.ne.s32.totalorder %s113, %s115
      %p119 = scmp.eq.s32.totalorder %s23, 0
      %p120 = por %p118, %p119
      %p121 = scmp.ne.s32.totalorder %s113, %s115
      %p122 = scmp.eq.s32.totalorder %s28, 1
      %p123 = por %p121, %p122
      %p124 = scmp.ne.s32.totalorder %s115, %s116
      %p125 = scmp.eq.s32.totalorder %s28, 0
      %p126 = por %p124, %p125
      %p127 = scmp.ne.s32.totalorder %s115, %s116
      %p128 = scmp.eq.s32.totalorder %s29, 1
      %p129 = por %p127, %p128
      %p131 = scmp.ne.s32.totalorder %s116, %s130
      %p132 = scmp.eq.s32.totalorder %s29, 0
      %p133 = por %p131, %p132
      %s135 = sadd.s32 %s134, 1
      %p138 = scmp.eq.s32.totalorder %s23, 1
      %p139 = scmp.ne.s32.totalorder %s134, %s136
      %p140 = scmp.eq.s32.totalorder %s23, 0
      %p141 = por %p139, %p140
      %p142 = scmp.ne.s32.totalorder %s134, %s136
      %p143 = scmp.eq.s32.totalorder %s28, 1
      %p144 = por %p142, %p143
      %p145 = scmp.ne.s32.totalorder %s136, %s137
      %p146 = scmp.eq.s32.totalorder %s28, 0
      %p147 = por %p145, %p146
      %p148 = scmp.ne.s32.totalorder %s136, %s137
      %p149 = scmp.eq.s32.totalorder %s29, 1
      %p150 = por %p148, %p149
      %p152 = scmp.ne.s32.totalorder %s137, %s151
      %p153 = scmp.eq.s32.totalorder %s29, 0
      %p154 = por %p152, %p153
      %s156 = sadd.s32 %s155, 1
      %p159 = scmp.eq.s32.totalorder %s23, 1
      %p160 = scmp.ne.s32.totalorder %s155, %s157
      %p161 = scmp.eq.s32.totalorder %s23, 0
      %p162 = por %p160, %p161
      %p163 = scmp.ne.s32.totalorder %s155, %s157
      %p164 = scmp.eq.s32.totalorder %s28, 1
      %p165 = por %p163, %p164
      %p166 = scmp.ne.s32.totalorder %s157, %s158
      %p167 = scmp.eq.s32.totalorder %s28, 0
      %p168 = por %p166, %p167
      %p169 = scmp.ne.s32.totalorder %s157, %s158
      %p170 = scmp.eq.s32.totalorder %s29, 1
      %p171 = por %p169, %p170
      %p173 = scmp.ne.s32.totalorder %s158, %s172
      %p174 = scmp.eq.s32.totalorder %s29, 0
      %p175 = por %p173, %p174
      %s177 = sadd.s32 %s176, 1
      %p180 = scmp.eq.s32.totalorder %s23, 1
      %p181 = scmp.ne.s32.totalorder %s176, %s178
      %p182 = scmp.eq.s32.totalorder %s23, 0
      %p183 = por %p181, %p182
      %p184 = scmp.ne.s32.totalorder %s176, %s178
      %p185 = scmp.eq.s32.totalorder %s28, 1
      %p186 = por %p184, %p185
      %p187 = scmp.ne.s32.totalorder %s178, %s179
      %p188 = scmp.eq.s32.totalorder %s28, 0
      %p189 = por %p187, %p188
      %p190 = scmp.ne.s32.totalorder %s178, %s179
      %p191 = scmp.eq.s32.totalorder %s29, 1
      %p192 = por %p190, %p191
      %p194 = scmp.ne.s32.totalorder %s179, %s193
      %p195 = scmp.eq.s32.totalorder %s29, 0
      %p196 = por %p194, %p195
      %s198 = sadd.s32 %s197, 1
      %p201 = scmp.eq.s32.totalorder %s23, 1
      %p202 = scmp.ne.s32.totalorder %s197, %s199
      %p203 = scmp.eq.s32.totalorder %s23, 0
      %p204 = por %p202, %p203
      %p205 = scmp.ne.s32.totalorder %s197, %s199
      %p206 = scmp.eq.s32.totalorder %s28, 1
      %p207 = por %p205, %p206
      %p208 = scmp.ne.s32.totalorder %s199, %s200
      %p209 = scmp.eq.s32.totalorder %s28, 0
      %p210 = por %p208, %p209
      %p211 = scmp.ne.s32.totalorder %s199, %s200
      %p212 = scmp.eq.s32.totalorder %s29, 1
      %p213 = por %p211, %p212
      %p215 = scmp.ne.s32.totalorder %s200, %s214
      %p216 = scmp.eq.s32.totalorder %s29, 0
      %p217 = por %p215, %p216
      %s219 = sadd.s32 %s218, 1
      %p222 = scmp.eq.s32.totalorder %s23, 1
      %p223 = scmp.ne.s32.totalorder %s218, %s220
      %p224 = scmp.eq.s32.totalorder %s23, 0
      %p225 = por %p223, %p224
      %p226 = scmp.ne.s32.totalorder %s218, %s220
      %p227 = scmp.eq.s32.totalorder %s28, 1
      %p228 = por %p226, %p227
      %p229 = scmp.ne.s32.totalorder %s220, %s221
      %p230 = scmp.eq.s32.totalorder %s28, 0
      %p231 = por %p229, %p230
      %p232 = scmp.ne.s32.totalorder %s220, %s221
      %p233 = scmp.eq.s32.totalorder %s29, 1
      %p234 = por %p232, %p233
      %p236 = scmp.ne.s32.totalorder %s221, %s235
      %p237 = scmp.eq.s32.totalorder %s29, 0
      %p238 = por %p236, %p237
      %s240 = sadd.s32 %s239, 1
      %p243 = scmp.eq.s32.totalorder %s23, 1
      %p244 = scmp.ne.s32.totalorder %s239, %s241
      %p245 = scmp.eq.s32.totalorder %s23, 0
      %p246 = por %p244, %p245
      %p247 = scmp.ne.s32.totalorder %s239, %s241
      %p248 = scmp.eq.s32.totalorder %s28, 1
      %p249 = por %p247, %p248
      %p250 = scmp.ne.s32.totalorder %s241, %s242
      %p251 = scmp.eq.s32.totalorder %s28, 0
      %p252 = por %p250, %p251
      %p253 = scmp.ne.s32.totalorder %s241, %s242
      %p254 = scmp.eq.s32.totalorder %s29, 1
      %p255 = por %p253, %p254
      %p257 = scmp.ne.s32.totalorder %s242, %s256
      %p258 = scmp.eq.s32.totalorder %s29, 0
      %p259 = por %p257, %p258
      %s261 = sadd.s32 %s260, 1
      %p264 = scmp.eq.s32.totalorder %s23, 1
      %p265 = scmp.ne.s32.totalorder %s260, %s262
      %p266 = scmp.eq.s32.totalorder %s23, 0
      %p267 = por %p265, %p266
      %p268 = scmp.ne.s32.totalorder %s260, %s262
      %p269 = scmp.eq.s32.totalorder %s28, 1
      %p270 = por %p268, %p269
      %p271 = scmp.ne.s32.totalorder %s262, %s263
      %p272 = scmp.eq.s32.totalorder %s28, 0
      %p273 = por %p271, %p272
      %p274 = scmp.ne.s32.totalorder %s262, %s263
      %p275 = scmp.eq.s32.totalorder %s29, 1
      %p276 = por %p274, %p275
      %p278 = scmp.ne.s32.totalorder %s263, %s277
      %p279 = scmp.eq.s32.totalorder %s29, 0
      %p280 = por %p278, %p279
      %s281 = ssub.s32 %s30, %s42
      %p282 = scmp.eq.s32.totalorder %s281, 0
      %s284 = sadd.s32 %s283, 1
      %s285 = scalar_select %p282, %s283, %s284
      %p288 = pneg %p282
      %p289 = scmp.eq.s32.totalorder %s23, 1
      %p290 = por %p288, %p289
      %p291 = scmp.ne.s32.totalorder %s283, %s286
      %p292 = scmp.eq.s32.totalorder %s23, 0
      %p293 = por %p291, %p292
      %p294 = scmp.ne.s32.totalorder %s283, %s286
      %p295 = scmp.eq.s32.totalorder %s28, 1
      %p296 = por %p294, %p295
      %p297 = scmp.ne.s32.totalorder %s286, %s287
      %p298 = scmp.eq.s32.totalorder %s28, 0
      %p299 = por %p297, %p298
      %p300 = scmp.ne.s32.totalorder %s286, %s287
      %p301 = scmp.eq.s32.totalorder %s29, 1
      %p302 = por %p300, %p301
      %p304 = scmp.ne.s32.totalorder %s287, %s303
      %p305 = scmp.eq.s32.totalorder %s29, 0
      %p306 = por %p304, %p305
      %p307 = scmp.le.s32.totalorder 1, %s23
      %p308 = scmp.lt.s32.totalorder %s23, 3
      %p309 = pnand %p307, %p308
      %p310 = pneg %p309
      // Predicated region
      $region9: #{tcn_forward_pallas.1} parent=5 // pred_check
        _
      $region10: #{tcn_forward_pallas.1} parent=5 // pred_check_branch
        %312 = sbr.rel (%p309) target = $region12
      $region11: #{tcn_forward_pallas.1} parent=5 // pred_region
        %s313 = ssub.s32 %s23, 1
        // Predicated region
        $region13: #{tcn_forward_pallas.1} parent=11 // pred_check
          %p314 = pneg %p84
        $region14: #{tcn_forward_pallas.1} parent=11 // pred_check_branch
          %316 = sbr.rel (%p314) target = $region16
        $region15: #{tcn_forward_pallas.1} parent=11 // pred_region
          %s318 = ssub.s32 2048, 2048
          %319 = vsyncadd [#allocation8], %s318
          %s320 = sshll.u32 [#allocation7], 4
          %s321 = int_to_ptr.vmem [resolvable:$true] %s320
          %326 = dma.hbm_to_vmem [thread:$0]  %s1, 2048, %s321, [#allocation8], 64, 64, 4
        $region16: #{tcn_forward_pallas.1} parent=11 // pred_fallthru
          _
        // Predicated region
        $region17: #{tcn_forward_pallas.1} parent=11 // pred_check
          %p327 = pneg %p105
        $region18: #{tcn_forward_pallas.1} parent=11 // pred_check_branch
          %329 = sbr.rel (%p327) target = $region20
        $region19: #{tcn_forward_pallas.1} parent=11 // pred_region
          _
        $region20: #{tcn_forward_pallas.1} parent=11 // pred_fallthru
          _
        // Predicated region
        $region21: #{tcn_forward_pallas.1} parent=11 // pred_check
          %p330 = pneg %p126
        $region22: #{tcn_forward_pallas.1} parent=11 // pred_check_branch
          %332 = sbr.rel (%p330) target = $region24
        $region23: #{tcn_forward_pallas.1} parent=11 // pred_region
          %s334 = ssub.s32 2048, 2048
          %335 = vsyncadd [#allocation11], %s334
          %s336 = sshll.u32 [#allocation10], 4
          %s337 = int_to_ptr.vmem [resolvable:$true] %s336
          %342 = dma.hbm_to_vmem [thread:$0]  %s3, 2048, %s337, [#allocation11], 64, 64, 4
        $region24: #{tcn_forward_pallas.1} parent=11 // pred_fallthru
          _
        // Predicated region
        $region25: #{tcn_forward_pallas.1} parent=11 // pred_check
          %p343 = pneg %p147
        $region26: #{tcn_forward_pallas.1} parent=11 // pred_check_branch
          %345 = sbr.rel (%p343) target = $region28
        $region27: #{tcn_forward_pallas.1} parent=11 // pred_region
          _
        $region28: #{tcn_forward_pallas.1} parent=11 // pred_fallthru
          _
        // Predicated region
        $region29: #{tcn_forward_pallas.1} parent=11 // pred_check
          %p346 = pneg %p168
        $region30: #{tcn_forward_pallas.1} parent=11 // pred_check_branch
          %348 = sbr.rel (%p346) target = $region32
        $region31: #{tcn_forward_pallas.1} parent=11 // pred_region
          _
        $region32: #{tcn_forward_pallas.1} parent=11 // pred_fallthru
          _
        // Predicated region
        $region33: #{tcn_forward_pallas.1} parent=11 // pred_check
          %p349 = pneg %p189
        $region34: #{tcn_forward_pallas.1} parent=11 // pred_check_branch
          %351 = sbr.rel (%p349) target = $region36
        $region35: #{tcn_forward_pallas.1} parent=11 // pred_region
          _
        $region36: #{tcn_forward_pallas.1} parent=11 // pred_fallthru
          _
        // Predicated region
        $region37: #{tcn_forward_pallas.1} parent=11 // pred_check
          %p352 = pneg %p210
        $region38: #{tcn_forward_pallas.1} parent=11 // pred_check_branch
          %354 = sbr.rel (%p352) target = $region40
        $region39: #{tcn_forward_pallas.1} parent=11 // pred_region
          %s356 = ssub.s32 2048, 2048
          %357 = vsyncadd [#allocation11], %s356
          %s358 = sshll.u32 [#allocation12], 4
          %s359 = int_to_ptr.vmem [resolvable:$true] %s358
          %364 = dma.hbm_to_vmem [thread:$0]  %s7, 2048, %s359, [#allocation11], 64, 64, 4
        $region40: #{tcn_forward_pallas.1} parent=11 // pred_fallthru
          _
        // Predicated region
        $region41: #{tcn_forward_pallas.1} parent=11 // pred_check
          %p365 = pneg %p231
        $region42: #{tcn_forward_pallas.1} parent=11 // pred_check_branch
          %367 = sbr.rel (%p365) target = $region44
        $region43: #{tcn_forward_pallas.1} parent=11 // pred_region
          _
        $region44: #{tcn_forward_pallas.1} parent=11 // pred_fallthru
          _
        // Predicated region
        $region45: #{tcn_forward_pallas.1} parent=11 // pred_check
          %p368 = pneg %p252
        $region46: #{tcn_forward_pallas.1} parent=11 // pred_check_branch
          %370 = sbr.rel (%p368) target = $region48
        $region47: #{tcn_forward_pallas.1} parent=11 // pred_region
          %s372 = ssub.s32 2048, 2048
          %373 = vsyncadd [#allocation14], %s372
          %s374 = sshll.u32 [#allocation13], 4
          %s375 = int_to_ptr.vmem [resolvable:$true] %s374
          %380 = dma.hbm_to_vmem [thread:$0]  %s9, 2048, %s375, [#allocation14], 64, 64, 4
        $region48: #{tcn_forward_pallas.1} parent=11 // pred_fallthru
          _
        // Predicated region
        $region49: #{tcn_forward_pallas.1} parent=11 // pred_check
          %p381 = pneg %p273
        $region50: #{tcn_forward_pallas.1} parent=11 // pred_check_branch
          %383 = sbr.rel (%p381) target = $region52
        $region51: #{tcn_forward_pallas.1} parent=11 // pred_region
          _
        $region52: #{tcn_forward_pallas.1} parent=11 // pred_fallthru
          _
      $region12: #{tcn_forward_pallas.1} parent=5 // pred_fallthru
        _
      %p384 = scmp.lt.s32.totalorder %s23, 2
      // Predicated region
      $region53: #{tcn_forward_pallas.1} parent=5 // pred_check
        %p385 = pneg %p384
      $region54: #{tcn_forward_pallas.1} parent=5 // pred_check_branch
        %387 = sbr.rel (%p385) target = $region56
      $region55: #{tcn_forward_pallas.1} parent=5 // pred_region
        // Predicated region
        $region57: #{tcn_forward_pallas.1} parent=55 // pred_check
          %p388 = pneg %p57
        $region58: #{tcn_forward_pallas.1} parent=55 // pred_check_branch
          %390 = sbr.rel (%p388) target = $region60
        $region59: #{tcn_forward_pallas.1} parent=55 // pred_region
          %s391 = smul.u32 2, %s31
          %p392 = scmp.lt.s32.totalorder %s30, 1
          %s393 = scalar_select %p392, %s30, 1
          %p394 = scmp.lt.s32.totalorder %s391, 1
          %s395 = scalar_select %p394, %s391, 1
          %s396 = smul.addr %s393, 2
          %s397 = sadd.s32 %s395, %s396
          %s398 = smul.addr %s397, 4
          %s399 = scalar_lea.vmem %s0, %s398
          %s400 = smul.u32 2, %s31
        $region60: #{tcn_forward_pallas.1} parent=55 // pred_fallthru
          _
      $region56: #{tcn_forward_pallas.1} parent=5 // pred_fallthru
        _
      %p401 = scmp.le.s32.totalorder 1, %s23
      %p402 = scmp.lt.s32.totalorder %s23, 3
      %p403 = pnand %p401, %p402
      %p404 = pneg %p403
      // Predicated region
      $region61: #{tcn_forward_pallas.1} parent=5 // pred_check
        _
      $region62: #{tcn_forward_pallas.1} parent=5 // pred_check_branch
        %406 = sbr.rel (%p403) target = $region64
      $region63: #{tcn_forward_pallas.1} parent=5 // pred_region
        %s407 = ssub.s32 %s23, 1
        // Predicated region
        $region65: #{tcn_forward_pallas.1} parent=63 // pred_check
          %p408 = pneg %p84
        $region66: #{tcn_forward_pallas.1} parent=63 // pred_check_branch
          %410 = sbr.rel (%p408) target = $region68
        $region67: #{tcn_forward_pallas.1} parent=63 // pred_region
          %411 = dma.done [#allocation8], 2048
        $region68: #{tcn_forward_pallas.1} parent=63 // pred_fallthru
          _
        // Predicated region
        $region69: #{tcn_forward_pallas.1} parent=63 // pred_check
          %p412 = pneg %p126
        $region70: #{tcn_forward_pallas.1} parent=63 // pred_check_branch
          %414 = sbr.rel (%p412) target = $region72
        $region71: #{tcn_forward_pallas.1} parent=63 // pred_region
          %415 = dma.done [#allocation11], 2048
        $region72: #{tcn_forward_pallas.1} parent=63 // pred_fallthru
          _
        // Predicated region
        $region73: #{tcn_forward_pallas.1} parent=63 // pred_check
          %p416 = pneg %p210
        $region74: #{tcn_forward_pallas.1} parent=63 // pred_check_branch
          %418 = sbr.rel (%p416) target = $region76
        $region75: #{tcn_forward_pallas.1} parent=63 // pred_region
          %419 = dma.done [#allocation11], 2048
        $region76: #{tcn_forward_pallas.1} parent=63 // pred_fallthru
          _
        // Predicated region
        $region77: #{tcn_forward_pallas.1} parent=63 // pred_check
          %p420 = pneg %p252
        $region78: #{tcn_forward_pallas.1} parent=63 // pred_check_branch
          %422 = sbr.rel (%p420) target = $region80
        $region79: #{tcn_forward_pallas.1} parent=63 // pred_region
          %423 = dma.done [#allocation14], 2048
        $region80: #{tcn_forward_pallas.1} parent=63 // pred_fallthru
          _
        %s424 = smul.u32 2, %s33
        %p425 = scmp.lt.s32.totalorder %s32, 1
        %s426 = scalar_select %p425, %s32, 1
        %p427 = scmp.lt.s32.totalorder %s424, 1
        %s428 = scalar_select %p427, %s424, 1
        %s429 = smul.addr %s426, 2
        %s430 = sadd.s32 %s428, %s429
        %s431 = smul.addr %s430, 4
        %s432 = scalar_lea.vmem %s0, %s431
        %p433 = pneg %p63
        %p434 = pneg %p60
        %p435 = pneg %p84
        %p436 = pneg %p81
        %p437 = pneg %p105
        %p438 = pneg %p102
        %p439 = pneg %p126
        %p440 = pneg %p123
        %p441 = pneg %p147
        %p442 = pneg %p144
        %p443 = pneg %p168
        %p444 = pneg %p165
        %p445 = pneg %p189
        %p446 = pneg %p186
        %p447 = pneg %p210
        %p448 = pneg %p207
        %p449 = pneg %p231
        %p450 = pneg %p228
        %p451 = pneg %p252
        %p452 = pneg %p249
        %p453 = pneg %p273
        %p454 = pneg %p270
        %p455 = pneg %p299
        %p456 = pneg %p296
        %s457 = sand.u32 %s286, 1
        %s458 = scalar_lea.sflag [#allocation9], %s457
        %s459 = sand.u32 %s286, 1
        %s460 = scalar_lea.vmem [#allocation15], %s459
        %s461 = smul.u32 2, %s33
        %p462 = scmp.lt.s32.totalorder %s32, 1
        %s463 = scalar_select %p462, %s32, 1
        %p464 = scmp.lt.s32.totalorder %s461, 1
        %s465 = scalar_select %p464, %s461, 1
        %s466 = smul.addr %s463, 2
        %s467 = sadd.s32 %s465, %s466
        %s468 = smul.addr %s467, 4
        %s469 = scalar_lea.vmem %s0, %s468
        %s470 = smul.u32 2, %s33
        %p472 = scmp.eq.s32.totalorder %s33, 0
        // Predicated region
        $region81: #{tcn_forward_pallas.1} parent=63 // pred_check
          %p473 = pneg %p472
        $region82: #{tcn_forward_pallas.1} parent=63 // pred_check_branch
          %475 = sbr.rel (%p473) target = $region84
        $region83: #{tcn_forward_pallas.1} parent=63 // pred_region
          %vm476 = vcmask 1040384
          %vm477 = vsmask.f32 256
          %vm478 = vmand %vm476, %vm477
          %v479 = vld [vmem:[#allocation2] sm:$0x1]
          %v480 = vsel %vm478, 0, %v479
          %481 = vst [vmem:[#allocation2] sm:$0x1] %v480
          %v482 = vld [vmem:[#allocation3] sm:$0x1]
          %v483 = vsel %vm478, 0, %v482
          %484 = vst [vmem:[#allocation3] sm:$0x1] %v483
          %485 = vst [vmem:[#allocation4] sm:$0x1] 0
          %486 = vst [vmem:[#allocation5] sm:$0x1] 0
          %487 = vst [vmem:[#allocation6] sm:$0x1] 0.0
        $region84: #{tcn_forward_pallas.1} parent=63 // pred_fallthru
          _
        %v488 = vld [vmem:[%s469] sm:$0xf]
        %v489 = vld [vmem:[%s469 + $0x4] sm:$0xf]
        %vm490 = vsmask.f32 256
        %vm491 = vsmask.f32 4368
        %vm492 = vmor %vm490, %vm491
        %v494 = vshrl.u32 %v488, 16
        %v496 = vrot.slane %v494, 7
        %v497 = vshll.u32 %v488, 16
        %v499 = vor.u32 %v496, %v497
        %v500 = vrot.slane %v496, 4
        %v502 = vshrl.u32 %v489, 16
        %v504 = vrot.slane %v502, 7
        %v505 = vshll.u32 %v489, 16
        %v507 = vor.u32 %v504, %v505
        %v508 = vsel %vm492, %v500, %v507
        %v509 = vrot.slane %v504, 4
        %vm513 = vcmask 1043456
        %vm514 = vsmask.f32 7938
        %vm515 = vmand %vm513, %vm514
        %v516 = vld [vmem:[#allocation2] sm:$0xf]
        %v517 = vsel %vm515, %v499, %v516
        %518 = vst [vmem:[#allocation2] sm:$0xf] %v517
        %519 = vst [vmem:[#allocation2 + $0x4] sm:$0xf] %v508
        %vm520 = vcmask 1040384
        %vm521 = vmand %vm520, %vm490
        %v522 = vld [vmem:[#allocation2 + $0x8] sm:$0x1]
        %v523 = vsel %vm521, %v509, %v522
        %524 = vst [vmem:[#allocation2 + $0x8] sm:$0x1] %v523
        %v525 = vld [vmem:[#allocation2] sm:$0xf]
        %v526 = vld [vmem:[#allocation2 + $0x4] sm:$0xf]
        %v527 = vld [vmem:[#allocation2 + $0x8] sm:$0x1]
        %v530 = vunpack.c.l.b16 %v525
        %v531 = vunpack.c.l.b16 %v526
        %v532 = vpack.c.b16 %v531, %v530
        %v535 = vunpack.c.l.b16 %v527
        %v536 = vpack.c.b16 %v535, %v535
        %vm537 = vsmask.f32 7424
        %v539 = vshrl.u32 %v532, 16
        %v541 = vshll.u32 %v532, 16
        %v543 = vrot.slane %v541, 1
        %v544 = vor.u32 %v539, %v543
        %v546 = vshll.u32 %v536, 16
        %v548 = vrot.slane %v546, 1
        %v549 = vsel %vm537, %v544, %v548
        %v551 = vld [vmem:[#allocation7] sm:$0xf]
        %v552 = vld [vmem:[#allocation7 + $0x4] sm:$0xf]
        %v553 = vld [vmem:[#allocation7 + $0x8] sm:$0xf]
        %v554 = vld [vmem:[#allocation7 + $0xc] sm:$0xf]
        %v555 = vld [vmem:[#allocation7 + $0x10] sm:$0xf]
        %v556 = vld [vmem:[#allocation7 + $0x14] sm:$0xf]
        %v557 = vld [vmem:[#allocation7 + $0x18] sm:$0xf]
        %v558 = vld [vmem:[#allocation7 + $0x1c] sm:$0xf]
        %v559 = vld [vmem:[#allocation7 + $0x20] sm:$0xf]
        %v560 = vld [vmem:[#allocation7 + $0x24] sm:$0xf]
        %v561 = vld [vmem:[#allocation7 + $0x28] sm:$0xf]
        %v562 = vld [vmem:[#allocation7 + $0x2c] sm:$0xf]
        %v563 = vld [vmem:[#allocation7 + $0x30] sm:$0xf]
        %v564 = vld [vmem:[#allocation7 + $0x34] sm:$0xf]
        %v565 = vld [vmem:[#allocation7 + $0x38] sm:$0xf]
        %v566 = vld [vmem:[#allocation7 + $0x3c] sm:$0xf]
        %v567 = vld [vmem:[#allocation7 + $0x40] sm:$0xf]
        %v568 = vld [vmem:[#allocation7 + $0x44] sm:$0xf]
        %v569 = vld [vmem:[#allocation7 + $0x48] sm:$0xf]
        %v570 = vld [vmem:[#allocation7 + $0x4c] sm:$0xf]
        %v571 = vld [vmem:[#allocation7 + $0x50] sm:$0xf]
        %v572 = vld [vmem:[#allocation7 + $0x54] sm:$0xf]
        %v573 = vld [vmem:[#allocation7 + $0x58] sm:$0xf]
        %v574 = vld [vmem:[#allocation7 + $0x5c] sm:$0xf]
        %v575 = vld [vmem:[#allocation7 + $0x60] sm:$0xf]
        %v576 = vld [vmem:[#allocation7 + $0x64] sm:$0xf]
        %v577 = vld [vmem:[#allocation7 + $0x68] sm:$0xf]
        %v578 = vld [vmem:[#allocation7 + $0x6c] sm:$0xf]
        %v579 = vld [vmem:[#allocation7 + $0x70] sm:$0xf]
        %v580 = vld [vmem:[#allocation7 + $0x74] sm:$0xf]
        %v581 = vld [vmem:[#allocation7 + $0x78] sm:$0xf]
        %v582 = vld [vmem:[#allocation7 + $0x7c] sm:$0xf]
        %v583 = vld [vmem:[%s2] sm:$0x1]
        %v585 = vlaneseq
        %v586 = vshrl.u32 %v585, 7
        %v587 = vsub.s32 0, %v586
        %v588 = vrot.slane %v583, %v587
        %v622 = vunpack.c.l.b16 %v551
        %v623 = vunpack.c.l.b16 %v552
        %v624 = vunpack.c.l.b16 %v553
        %v625 = vunpack.c.l.b16 %v554
        %v626 = vunpack.c.l.b16 %v555
        %v627 = vunpack.c.l.b16 %v556
        %v628 = vunpack.c.l.b16 %v557
        %v629 = vunpack.c.l.b16 %v558
        %v630 = vunpack.c.l.b16 %v559
        %v631 = vunpack.c.l.b16 %v560
        %v632 = vunpack.c.l.b16 %v561
        %v633 = vunpack.c.l.b16 %v562
        %v634 = vunpack.c.l.b16 %v563
        %v635 = vunpack.c.l.b16 %v564
        %v636 = vunpack.c.l.b16 %v565
        %v637 = vunpack.c.l.b16 %v566
        %v638 = vunpack.c.l.b16 %v567
        %v639 = vunpack.c.l.b16 %v568
        %v640 = vunpack.c.l.b16 %v569
        %v641 = vunpack.c.l.b16 %v570
        %v642 = vunpack.c.l.b16 %v571
        %v643 = vunpack.c.l.b16 %v572
        %v644 = vunpack.c.l.b16 %v573
        %v645 = vunpack.c.l.b16 %v574
        %v646 = vunpack.c.l.b16 %v575
        %v647 = vunpack.c.l.b16 %v576
        %v648 = vunpack.c.l.b16 %v577
        %v649 = vunpack.c.l.b16 %v578
        %v650 = vunpack.c.l.b16 %v579
        %v651 = vunpack.c.l.b16 %v580
        %v652 = vunpack.c.l.b16 %v581
        %v653 = vunpack.c.l.b16 %v582
        %v654 = vpack.c.b16 %v623, %v622
        %v655 = vpack.c.b16 %v625, %v624
        %v656 = vpack.c.b16 %v627, %v626
        %v657 = vpack.c.b16 %v629, %v628
        %v658 = vpack.c.b16 %v631, %v630
        %v659 = vpack.c.b16 %v633, %v632
        %v660 = vpack.c.b16 %v635, %v634
        %v661 = vpack.c.b16 %v637, %v636
        %v662 = vpack.c.b16 %v639, %v638
        %v663 = vpack.c.b16 %v641, %v640
        %v664 = vpack.c.b16 %v643, %v642
        %v665 = vpack.c.b16 %v645, %v644
        %v666 = vpack.c.b16 %v647, %v646
        %v667 = vpack.c.b16 %v649, %v648
        %v668 = vpack.c.b16 %v651, %v650
        %v669 = vpack.c.b16 %v653, %v652
        %686 = vmatprep.subr.bf16.mxu0 0
        %687 = vmatpush1.bf16.msra.mxu0 %v654
        %688 = vmatprep.subr.bf16.mxu0 0
        %689 = vmatpush1.bf16.msra.mxu0 %v655
        %690 = vmatprep.subr.bf16.mxu0 0
        %691 = vmatpush1.bf16.msra.mxu0 %v656
        %692 = vmatprep.subr.bf16.mxu0 0
        %693 = vmatpush1.bf16.msra.mxu0 %v657
        %694 = vmatprep.subr.bf16.mxu0 0
        %695 = vmatpush1.bf16.msra.mxu0 %v658
        %696 = vmatprep.subr.bf16.mxu0 0
        %697 = vmatpush1.bf16.msra.mxu0 %v659
        %698 = vmatprep.subr.bf16.mxu0 0
        %699 = vmatpush1.bf16.msra.mxu0 %v660
        %700 = vmatprep.subr.bf16.mxu0 0
        %701 = vmatpush1.bf16.msra.mxu0 %v661
        %702 = vmatprep.subr.bf16.mxu0 0
        %703 = vmatpush1.bf16.msra.mxu0 %v662
        %704 = vmatprep.subr.bf16.mxu0 0
        %705 = vmatpush1.bf16.msra.mxu0 %v663
        %706 = vmatprep.subr.bf16.mxu0 0
        %707 = vmatpush1.bf16.msra.mxu0 %v664
        %708 = vmatprep.subr.bf16.mxu0 0
        %709 = vmatpush1.bf16.msra.mxu0 %v665
        %710 = vmatprep.subr.bf16.mxu0 0
        %711 = vmatpush1.bf16.msra.mxu0 %v666
        %712 = vmatprep.subr.bf16.mxu0 0
        %713 = vmatpush1.bf16.msra.mxu0 %v667
        %714 = vmatprep.subr.bf16.mxu0 0
        %715 = vmatpush1.bf16.msra.mxu0 %v668
        %716 = vmatprep.subr.bf16.mxu0 0
        %717 = vmatpush1.bf16.msra.mxu0 %v669
        %718 = vmatprep.mubr.bf16.mxu0 %v549
        %719 = vmatmul.mubr.bf16.gmra.mrb[0].mxu0 %v532
        %v720 = vpop.f32.mrb[0].mxu0
        %v721 = vadd.f32 %v588, %v720
        %v722 = vpop.f32.mrb[0].mxu0
        %v723 = vpop.f32.mrb[0].mxu0
        %v724 = vadd.f32 %v588, %v723
        %v725 = vpop.f32.mrb[0].mxu0
        %726 = vdwg.mxu0
        %v727 = vmax.f32 %v721, 0.0
        %v728 = vmax.f32 %v724, 0.0
        %v729 = vpack.c.bf16 %v728, %v727
        %v731 = vunpack.c.l.b16 %v729
        %v732 = vunpack.c.h.b16 %v729
        %v733 = vpack.c.b16 %v731, %v731
        %v734 = vpack.c.b16 %v732, %v732
        %v736 = vshrl.u32 %v733, 16
        %v738 = vrot.slane %v736, 7
        %v739 = vshll.u32 %v733, 16
        %v741 = vor.u32 %v738, %v739
        %v742 = vrot.slane %v738, 4
        %v744 = vshrl.u32 %v734, 16
        %v746 = vrot.slane %v744, 7
        %v747 = vshll.u32 %v734, 16
        %v749 = vor.u32 %v746, %v747
        %v750 = vsel %vm492, %v742, %v749
        %v751 = vrot.slane %v746, 4
        %v755 = vld [vmem:[#allocation3] sm:$0xf]
        %v756 = vsel %vm515, %v741, %v755
        %757 = vst [vmem:[#allocation3] sm:$0xf] %v756
        %758 = vst [vmem:[#allocation3 + $0x4] sm:$0xf] %v750
        %v759 = vld [vmem:[#allocation3 + $0x8] sm:$0x1]
        %v760 = vsel %vm521, %v751, %v759
        %761 = vst [vmem:[#allocation3 + $0x8] sm:$0x1] %v760
        %v762 = vld [vmem:[#allocation3] sm:$0xf]
        %v763 = vld [vmem:[#allocation3 + $0x4] sm:$0xf]
        %v764 = vld [vmem:[#allocation3 + $0x8] sm:$0x1]
        %v767 = vunpack.c.l.b16 %v762
        %v768 = vunpack.c.l.b16 %v763
        %v769 = vpack.c.b16 %v768, %v767
        %v772 = vunpack.c.l.b16 %v764
        %v773 = vpack.c.b16 %v772, %v772
        %v775 = vshrl.u32 %v769, 16
        %v777 = vshll.u32 %v769, 16
        %v779 = vrot.slane %v777, 1
        %v780 = vor.u32 %v775, %v779
        %v782 = vshll.u32 %v773, 16
        %v784 = vrot.slane %v782, 1
        %v785 = vsel %vm537, %v780, %v784
        %v787 = vld [vmem:[#allocation10] sm:$0xf]
        %v788 = vld [vmem:[#allocation10 + $0x4] sm:$0xf]
        %v789 = vld [vmem:[#allocation10 + $0x8] sm:$0xf]
        %v790 = vld [vmem:[#allocation10 + $0xc] sm:$0xf]
        %v791 = vld [vmem:[#allocation10 + $0x10] sm:$0xf]
        %v792 = vld [vmem:[#allocation10 + $0x14] sm:$0xf]
        %v793 = vld [vmem:[#allocation10 + $0x18] sm:$0xf]
        %v794 = vld [vmem:[#allocation10 + $0x1c] sm:$0xf]
        %v795 = vld [vmem:[#allocation10 + $0x20] sm:$0xf]
        %v796 = vld [vmem:[#allocation10 + $0x24] sm:$0xf]
        %v797 = vld [vmem:[#allocation10 + $0x28] sm:$0xf]
        %v798 = vld [vmem:[#allocation10 + $0x2c] sm:$0xf]
        %v799 = vld [vmem:[#allocation10 + $0x30] sm:$0xf]
        %v800 = vld [vmem:[#allocation10 + $0x34] sm:$0xf]
        %v801 = vld [vmem:[#allocation10 + $0x38] sm:$0xf]
        %v802 = vld [vmem:[#allocation10 + $0x3c] sm:$0xf]
        %v803 = vld [vmem:[#allocation10 + $0x40] sm:$0xf]
        %v804 = vld [vmem:[#allocation10 + $0x44] sm:$0xf]
        %v805 = vld [vmem:[#allocation10 + $0x48] sm:$0xf]
        %v806 = vld [vmem:[#allocation10 + $0x4c] sm:$0xf]
        %v807 = vld [vmem:[#allocation10 + $0x50] sm:$0xf]
        %v808 = vld [vmem:[#allocation10 + $0x54] sm:$0xf]
        %v809 = vld [vmem:[#allocation10 + $0x58] sm:$0xf]
        %v810 = vld [vmem:[#allocation10 + $0x5c] sm:$0xf]
        %v811 = vld [vmem:[#allocation10 + $0x60] sm:$0xf]
        %v812 = vld [vmem:[#allocation10 + $0x64] sm:$0xf]
        %v813 = vld [vmem:[#allocation10 + $0x68] sm:$0xf]
        %v814 = vld [vmem:[#allocation10 + $0x6c] sm:$0xf]
        %v815 = vld [vmem:[#allocation10 + $0x70] sm:$0xf]
        %v816 = vld [vmem:[#allocation10 + $0x74] sm:$0xf]
        %v817 = vld [vmem:[#allocation10 + $0x78] sm:$0xf]
        %v818 = vld [vmem:[#allocation10 + $0x7c] sm:$0xf]
        %v819 = vld [vmem:[%s4] sm:$0x1]
        %v821 = vlaneseq
        %v822 = vshrl.u32 %v821, 7
        %v823 = vsub.s32 0, %v822
        %v824 = vrot.slane %v819, %v823
        %v858 = vunpack.c.l.b16 %v787
        %v859 = vunpack.c.l.b16 %v788
        %v860 = vunpack.c.l.b16 %v789
        %v861 = vunpack.c.l.b16 %v790
        %v862 = vunpack.c.l.b16 %v791
        %v863 = vunpack.c.l.b16 %v792
        %v864 = vunpack.c.l.b16 %v793
        %v865 = vunpack.c.l.b16 %v794
        %v866 = vunpack.c.l.b16 %v795
        %v867 = vunpack.c.l.b16 %v796
        %v868 = vunpack.c.l.b16 %v797
        %v869 = vunpack.c.l.b16 %v798
        %v870 = vunpack.c.l.b16 %v799
        %v871 = vunpack.c.l.b16 %v800
        %v872 = vunpack.c.l.b16 %v801
        %v873 = vunpack.c.l.b16 %v802
        %v874 = vunpack.c.l.b16 %v803
        %v875 = vunpack.c.l.b16 %v804
        %v876 = vunpack.c.l.b16 %v805
        %v877 = vunpack.c.l.b16 %v806
        %v878 = vunpack.c.l.b16 %v807
        %v879 = vunpack.c.l.b16 %v808
        %v880 = vunpack.c.l.b16 %v809
        %v881 = vunpack.c.l.b16 %v810
        %v882 = vunpack.c.l.b16 %v811
        %v883 = vunpack.c.l.b16 %v812
        %v884 = vunpack.c.l.b16 %v813
        %v885 = vunpack.c.l.b16 %v814
        %v886 = vunpack.c.l.b16 %v815
        %v887 = vunpack.c.l.b16 %v816
        %v888 = vunpack.c.l.b16 %v817
        %v889 = vunpack.c.l.b16 %v818
        %v890 = vpack.c.b16 %v859, %v858
        %v891 = vpack.c.b16 %v861, %v860
        %v892 = vpack.c.b16 %v863, %v862
        %v893 = vpack.c.b16 %v865, %v864
        %v894 = vpack.c.b16 %v867, %v866
        %v895 = vpack.c.b16 %v869, %v868
        %v896 = vpack.c.b16 %v871, %v870
        %v897 = vpack.c.b16 %v873, %v872
        %v898 = vpack.c.b16 %v875, %v874
        %v899 = vpack.c.b16 %v877, %v876
        %v900 = vpack.c.b16 %v879, %v878
        %v901 = vpack.c.b16 %v881, %v880
        %v902 = vpack.c.b16 %v883, %v882
        %v903 = vpack.c.b16 %v885, %v884
        %v904 = vpack.c.b16 %v887, %v886
        %v905 = vpack.c.b16 %v889, %v888
        %922 = vmatprep.subr.bf16.mxu0 0
        %923 = vmatpush1.bf16.msra.mxu0 %v890
        %924 = vmatprep.subr.bf16.mxu0 0
        %925 = vmatpush1.bf16.msra.mxu0 %v891
        %926 = vmatprep.subr.bf16.mxu0 0
        %927 = vmatpush1.bf16.msra.mxu0 %v892
        %928 = vmatprep.subr.bf16.mxu0 0
        %929 = vmatpush1.bf16.msra.mxu0 %v893
        %930 = vmatprep.subr.bf16.mxu0 0
        %931 = vmatpush1.bf16.msra.mxu0 %v894
        %932 = vmatprep.subr.bf16.mxu0 0
        %933 = vmatpush1.bf16.msra.mxu0 %v895
        %934 = vmatprep.subr.bf16.mxu0 0
        %935 = vmatpush1.bf16.msra.mxu0 %v896
        %936 = vmatprep.subr.bf16.mxu0 0
        %937 = vmatpush1.bf16.msra.mxu0 %v897
        %938 = vmatprep.subr.bf16.mxu0 0
        %939 = vmatpush1.bf16.msra.mxu0 %v898
        %940 = vmatprep.subr.bf16.mxu0 0
        %941 = vmatpush1.bf16.msra.mxu0 %v899
        %942 = vmatprep.subr.bf16.mxu0 0
        %943 = vmatpush1.bf16.msra.mxu0 %v900
        %944 = vmatprep.subr.bf16.mxu0 0
        %945 = vmatpush1.bf16.msra.mxu0 %v901
        %946 = vmatprep.subr.bf16.mxu0 0
        %947 = vmatpush1.bf16.msra.mxu0 %v902
        %948 = vmatprep.subr.bf16.mxu0 0
        %949 = vmatpush1.bf16.msra.mxu0 %v903
        %950 = vmatprep.subr.bf16.mxu0 0
        %951 = vmatpush1.bf16.msra.mxu0 %v904
        %952 = vmatprep.subr.bf16.mxu0 0
        %953 = vmatpush1.bf16.msra.mxu0 %v905
        %954 = vmatprep.mubr.bf16.mxu0 %v785
        %955 = vmatmul.mubr.bf16.gmra.mrb[0].mxu0 %v769
        %v956 = vpop.f32.mrb[0].mxu0
        %v957 = vadd.f32 %v824, %v956
        %v958 = vpop.f32.mrb[0].mxu0
        %v959 = vpop.f32.mrb[0].mxu0
        %v960 = vadd.f32 %v824, %v959
        %v961 = vpop.f32.mrb[0].mxu0
        %962 = vdwg.mxu0
        %v963 = vmax.f32 %v957, 0.0
        %v964 = vmax.f32 %v960, 0.0
        %v965 = vld [vmem:[%s5] sm:$0xf]
        %v966 = vld [vmem:[%s5 + $0x4] sm:$0xf]
        %v967 = vld [vmem:[%s5 + $0x8] sm:$0xf]
        %v968 = vld [vmem:[%s5 + $0xc] sm:$0xf]
        %v969 = vld [vmem:[%s5 + $0x10] sm:$0xf]
        %v970 = vld [vmem:[%s5 + $0x14] sm:$0xf]
        %v971 = vld [vmem:[%s5 + $0x18] sm:$0xf]
        %v972 = vld [vmem:[%s5 + $0x1c] sm:$0xf]
        %v973 = vld [vmem:[%s5 + $0x20] sm:$0xf]
        %v974 = vld [vmem:[%s5 + $0x24] sm:$0xf]
        %v975 = vld [vmem:[%s5 + $0x28] sm:$0xf]
        %v976 = vld [vmem:[%s5 + $0x2c] sm:$0xf]
        %v977 = vld [vmem:[%s5 + $0x30] sm:$0xf]
        %v978 = vld [vmem:[%s5 + $0x34] sm:$0xf]
        %v979 = vld [vmem:[%s5 + $0x38] sm:$0xf]
        %v980 = vld [vmem:[%s5 + $0x3c] sm:$0xf]
        %v981 = vld [vmem:[%s6] sm:$0x1]
        %v983 = vlaneseq
        %v984 = vshrl.u32 %v983, 7
        %v985 = vsub.s32 0, %v984
        %v986 = vrot.slane %v981, %v985
        %v990 = vunpack.c.l.b16 %v488
        %v991 = vunpack.c.l.b16 %v489
        %v992 = vpack.c.b16 %v991, %v990
        %v1010 = vunpack.c.l.b16 %v965
        %v1011 = vunpack.c.l.b16 %v966
        %v1012 = vunpack.c.l.b16 %v967
        %v1013 = vunpack.c.l.b16 %v968
        %v1014 = vunpack.c.l.b16 %v969
        %v1015 = vunpack.c.l.b16 %v970
        %v1016 = vunpack.c.l.b16 %v971
        %v1017 = vunpack.c.l.b16 %v972
        %v1018 = vunpack.c.l.b16 %v973
        %v1019 = vunpack.c.l.b16 %v974
        %v1020 = vunpack.c.l.b16 %v975
        %v1021 = vunpack.c.l.b16 %v976
        %v1022 = vunpack.c.l.b16 %v977
        %v1023 = vunpack.c.l.b16 %v978
        %v1024 = vunpack.c.l.b16 %v979
        %v1025 = vunpack.c.l.b16 %v980
        %v1026 = vpack.c.b16 %v1011, %v1010
        %v1027 = vpack.c.b16 %v1013, %v1012
        %v1028 = vpack.c.b16 %v1015, %v1014
        %v1029 = vpack.c.b16 %v1017, %v1016
        %v1030 = vpack.c.b16 %v1019, %v1018
        %v1031 = vpack.c.b16 %v1021, %v1020
        %v1032 = vpack.c.b16 %v1023, %v1022
        %v1033 = vpack.c.b16 %v1025, %v1024
        %1042 = vmatprep.subr.bf16.mxu0 0
        %1043 = vmatpush1.bf16.msra.mxu0 %v1026
        %1044 = vmatprep.subr.bf16.mxu0 0
        %1045 = vmatpush1.bf16.msra.mxu0 %v1027
        %1046 = vmatprep.subr.bf16.mxu0 0
        %1047 = vmatpush1.bf16.msra.mxu0 %v1028
        %1048 = vmatprep.subr.bf16.mxu0 0
        %1049 = vmatpush1.bf16.msra.mxu0 %v1029
        %1050 = vmatprep.subr.bf16.mxu0 0
        %1051 = vmatpush1.bf16.msra.mxu0 %v1030
        %1052 = vmatprep.subr.bf16.mxu0 0
        %1053 = vmatpush1.bf16.msra.mxu0 %v1031
        %1054 = vmatprep.subr.bf16.mxu0 0
        %1055 = vmatpush1.bf16.msra.mxu0 %v1032
        %1056 = vmatprep.subr.bf16.mxu0 0
        %1057 = vmatpush1.bf16.msra.mxu0 %v1033
        %1058 = vmatprep.subr.bf16.mxu0 0
        %1059 = vmatpush1.bf16.msra.mxu0 0
        %1060 = vmatprep.subr.bf16.mxu0 0
        %1061 = vmatpush1.bf16.msra.mxu0 0
        %1062 = vmatprep.subr.bf16.mxu0 0
        %1063 = vmatpush1.bf16.msra.mxu0 0
        %1064 = vmatprep.subr.bf16.mxu0 0
        %1065 = vmatpush1.bf16.msra.mxu0 0
        %1066 = vmatprep.subr.bf16.mxu0 0
        %1067 = vmatpush1.bf16.msra.mxu0 0
        %1068 = vmatprep.subr.bf16.mxu0 0
        %1069 = vmatpush1.bf16.msra.mxu0 0
        %1070 = vmatprep.subr.bf16.mxu0 0
        %1071 = vmatpush1.bf16.msra.mxu0 0
        %1072 = vmatprep.subr.bf16.mxu0 0
        %1073 = vmatpush1.bf16.msra.mxu0 0
        %1074 = vmatprep.mubr.bf16.mxu0 0
        %1075 = vmatmul.mubr.bf16.gmra.mrb[0].mxu0 %v992
        %v1076 = vpop.f32.mrb[0].mxu0
        %v1077 = vadd.f32 %v986, %v1076
        %v1078 = vpop.f32.mrb[0].mxu0
        %v1079 = vpop.f32.mrb[0].mxu0
        %v1080 = vadd.f32 %v986, %v1079
        %v1081 = vpop.f32.mrb[0].mxu0
        %1082 = vdwg.mxu0
        %v1083 = vadd.f32 %v963, %v1077
        %v1084 = vadd.f32 %v964, %v1080
        %v1085 = vmax.f32 %v1083, 0.0
        %v1086 = vmax.f32 %v1084, 0.0
        %v1087 = vpack.c.bf16 %v1086, %v1085
        %v1089 = vunpack.c.l.b16 %v1087
        %v1090 = vunpack.c.h.b16 %v1087
        %v1091 = vpack.c.b16 %v1089, %v1089
        %v1092 = vpack.c.b16 %v1090, %v1090
        %vm1093 = vcmask 1044484
        %vm1094 = vmor %vm520, %vm1093
        %v1095 = vrot.slane %v1091, 7
        %v1096 = vrot.slane %v1095, 4
        %v1097 = vrot.slane %v1092, 7
        %v1098 = vsel %vm1094, %v1096, %v1097
        %v1099 = vrot.slane %v1097, 4
        %1103 = vst [vmem:[#allocation4] sm:$0xe] %v1095
        %1104 = vst [vmem:[#allocation4 + $0x4] sm:$0xf] %v1098
        %1105 = vst [vmem:[#allocation4 + $0x8] sm:$0x1] %v1099
        %v1106 = vld [vmem:[#allocation4] sm:$0xf]
        %v1107 = vld [vmem:[#allocation4 + $0x4] sm:$0xf]
        %v1108 = vld [vmem:[#allocation4] sm:$0xe]
        %v1109 = vld [vmem:[#allocation4 + $0x8] sm:$0x1]
        %v1112 = vunpack.c.l.b16 %v1106
        %v1113 = vunpack.c.l.b16 %v1107
        %v1114 = vpack.c.b16 %v1113, %v1112
        %v1118 = vunpack.c.l.b16 %v1108
        %v1119 = vunpack.c.l.b16 %v1109
        %v1120 = vpack.c.b16 %v1113, %v1118
        %v1121 = vpack.c.b16 %v1119, %v1119
        %vm1122 = vcmask 1046528
        %v1123 = vrot.slane %v1120, 1
        %v1124 = vrot.slane %v1121, 1
        %v1125 = vsel %vm1122, %v1123, %v1124
        %v1127 = vld [vmem:[#allocation12] sm:$0xf]
        %v1128 = vld [vmem:[#allocation12 + $0x4] sm:$0xf]
        %v1129 = vld [vmem:[#allocation12 + $0x8] sm:$0xf]
        %v1130 = vld [vmem:[#allocation12 + $0xc] sm:$0xf]
        %v1131 = vld [vmem:[#allocation12 + $0x10] sm:$0xf]
        %v1132 = vld [vmem:[#allocation12 + $0x14] sm:$0xf]
        %v1133 = vld [vmem:[#allocation12 + $0x18] sm:$0xf]
        %v1134 = vld [vmem:[#allocation12 + $0x1c] sm:$0xf]
        %v1135 = vld [vmem:[#allocation12 + $0x20] sm:$0xf]
        %v1136 = vld [vmem:[#allocation12 + $0x24] sm:$0xf]
        %v1137 = vld [vmem:[#allocation12 + $0x28] sm:$0xf]
        %v1138 = vld [vmem:[#allocation12 + $0x2c] sm:$0xf]
        %v1139 = vld [vmem:[#allocation12 + $0x30] sm:$0xf]
        %v1140 = vld [vmem:[#allocation12 + $0x34] sm:$0xf]
        %v1141 = vld [vmem:[#allocation12 + $0x38] sm:$0xf]
        %v1142 = vld [vmem:[#allocation12 + $0x3c] sm:$0xf]
        %v1143 = vld [vmem:[#allocation12 + $0x40] sm:$0xf]
        %v1144 = vld [vmem:[#allocation12 + $0x44] sm:$0xf]
        %v1145 = vld [vmem:[#allocation12 + $0x48] sm:$0xf]
        %v1146 = vld [vmem:[#allocation12 + $0x4c] sm:$0xf]
        %v1147 = vld [vmem:[#allocation12 + $0x50] sm:$0xf]
        %v1148 = vld [vmem:[#allocation12 + $0x54] sm:$0xf]
        %v1149 = vld [vmem:[#allocation12 + $0x58] sm:$0xf]
        %v1150 = vld [vmem:[#allocation12 + $0x5c] sm:$0xf]
        %v1151 = vld [vmem:[#allocation12 + $0x60] sm:$0xf]
        %v1152 = vld [vmem:[#allocation12 + $0x64] sm:$0xf]
        %v1153 = vld [vmem:[#allocation12 + $0x68] sm:$0xf]
        %v1154 = vld [vmem:[#allocation12 + $0x6c] sm:$0xf]
        %v1155 = vld [vmem:[#allocation12 + $0x70] sm:$0xf]
        %v1156 = vld [vmem:[#allocation12 + $0x74] sm:$0xf]
        %v1157 = vld [vmem:[#allocation12 + $0x78] sm:$0xf]
        %v1158 = vld [vmem:[#allocation12 + $0x7c] sm:$0xf]
        %v1159 = vld [vmem:[%s8] sm:$0x1]
        %v1161 = vlaneseq
        %v1162 = vshrl.u32 %v1161, 7
        %v1163 = vsub.s32 0, %v1162
        %v1164 = vrot.slane %v1159, %v1163
        %v1198 = vunpack.c.l.b16 %v1127
        %v1199 = vunpack.c.l.b16 %v1128
        %v1200 = vunpack.c.l.b16 %v1129
        %v1201 = vunpack.c.l.b16 %v1130
        %v1202 = vunpack.c.l.b16 %v1131
        %v1203 = vunpack.c.l.b16 %v1132
        %v1204 = vunpack.c.l.b16 %v1133
        %v1205 = vunpack.c.l.b16 %v1134
        %v1206 = vunpack.c.l.b16 %v1135
        %v1207 = vunpack.c.l.b16 %v1136
        %v1208 = vunpack.c.l.b16 %v1137
        %v1209 = vunpack.c.l.b16 %v1138
        %v1210 = vunpack.c.l.b16 %v1139
        %v1211 = vunpack.c.l.b16 %v1140
        %v1212 = vunpack.c.l.b16 %v1141
        %v1213 = vunpack.c.l.b16 %v1142
        %v1214 = vunpack.c.l.b16 %v1143
        %v1215 = vunpack.c.l.b16 %v1144
        %v1216 = vunpack.c.l.b16 %v1145
        %v1217 = vunpack.c.l.b16 %v1146
        %v1218 = vunpack.c.l.b16 %v1147
        %v1219 = vunpack.c.l.b16 %v1148
        %v1220 = vunpack.c.l.b16 %v1149
        %v1221 = vunpack.c.l.b16 %v1150
        %v1222 = vunpack.c.l.b16 %v1151
        %v1223 = vunpack.c.l.b16 %v1152
        %v1224 = vunpack.c.l.b16 %v1153
        %v1225 = vunpack.c.l.b16 %v1154
        %v1226 = vunpack.c.l.b16 %v1155
        %v1227 = vunpack.c.l.b16 %v1156
        %v1228 = vunpack.c.l.b16 %v1157
        %v1229 = vunpack.c.l.b16 %v1158
        %v1230 = vpack.c.b16 %v1199, %v1198
        %v1231 = vpack.c.b16 %v1201, %v1200
        %v1232 = vpack.c.b16 %v1203, %v1202
        %v1233 = vpack.c.b16 %v1205, %v1204
        %v1234 = vpack.c.b16 %v1207, %v1206
        %v1235 = vpack.c.b16 %v1209, %v1208
        %v1236 = vpack.c.b16 %v1211, %v1210
        %v1237 = vpack.c.b16 %v1213, %v1212
        %v1238 = vpack.c.b16 %v1215, %v1214
        %v1239 = vpack.c.b16 %v1217, %v1216
        %v1240 = vpack.c.b16 %v1219, %v1218
        %v1241 = vpack.c.b16 %v1221, %v1220
        %v1242 = vpack.c.b16 %v1223, %v1222
        %v1243 = vpack.c.b16 %v1225, %v1224
        %v1244 = vpack.c.b16 %v1227, %v1226
        %v1245 = vpack.c.b16 %v1229, %v1228
        %1262 = vmatprep.subr.bf16.mxu0 0
        %1263 = vmatpush1.bf16.msra.mxu0 %v1230
        %1264 = vmatprep.subr.bf16.mxu0 0
        %1265 = vmatpush1.bf16.msra.mxu0 %v1231
        %1266 = vmatprep.subr.bf16.mxu0 0
        %1267 = vmatpush1.bf16.msra.mxu0 %v1232
        %1268 = vmatprep.subr.bf16.mxu0 0
        %1269 = vmatpush1.bf16.msra.mxu0 %v1233
        %1270 = vmatprep.subr.bf16.mxu0 0
        %1271 = vmatpush1.bf16.msra.mxu0 %v1234
        %1272 = vmatprep.subr.bf16.mxu0 0
        %1273 = vmatpush1.bf16.msra.mxu0 %v1235
        %1274 = vmatprep.subr.bf16.mxu0 0
        %1275 = vmatpush1.bf16.msra.mxu0 %v1236
        %1276 = vmatprep.subr.bf16.mxu0 0
        %1277 = vmatpush1.bf16.msra.mxu0 %v1237
        %1278 = vmatprep.subr.bf16.mxu0 0
        %1279 = vmatpush1.bf16.msra.mxu0 %v1238
        %1280 = vmatprep.subr.bf16.mxu0 0
        %1281 = vmatpush1.bf16.msra.mxu0 %v1239
        %1282 = vmatprep.subr.bf16.mxu0 0
        %1283 = vmatpush1.bf16.msra.mxu0 %v1240
        %1284 = vmatprep.subr.bf16.mxu0 0
        %1285 = vmatpush1.bf16.msra.mxu0 %v1241
        %1286 = vmatprep.subr.bf16.mxu0 0
        %1287 = vmatpush1.bf16.msra.mxu0 %v1242
        %1288 = vmatprep.subr.bf16.mxu0 0
        %1289 = vmatpush1.bf16.msra.mxu0 %v1243
        %1290 = vmatprep.subr.bf16.mxu0 0
        %1291 = vmatpush1.bf16.msra.mxu0 %v1244
        %1292 = vmatprep.subr.bf16.mxu0 0
        %1293 = vmatpush1.bf16.msra.mxu0 %v1245
        %1294 = vmatprep.mubr.bf16.mxu0 %v1125
        %1295 = vmatmul.mubr.bf16.gmra.mrb[0].mxu0 %v1114
        %v1296 = vpop.f32.mrb[0].mxu0
        %v1297 = vadd.f32 %v1164, %v1296
        %v1298 = vpop.f32.mrb[0].mxu0
        %v1299 = vpop.f32.mrb[0].mxu0
        %v1300 = vadd.f32 %v1164, %v1299
        %v1301 = vpop.f32.mrb[0].mxu0
        %1302 = vdwg.mxu0
        %v1303 = vmax.f32 %v1297, 0.0
        %v1304 = vmax.f32 %v1300, 0.0
        %v1305 = vpack.c.bf16 %v1304, %v1303
        %v1307 = vunpack.c.l.b16 %v1305
        %v1308 = vunpack.c.h.b16 %v1305
        %v1309 = vpack.c.b16 %v1307, %v1307
        %v1310 = vpack.c.b16 %v1308, %v1308
        %v1311 = vrot.slane %v1309, 7
        %v1312 = vrot.slane %v1311, 4
        %v1313 = vrot.slane %v1310, 7
        %v1314 = vsel %vm1094, %v1312, %v1313
        %v1315 = vrot.slane %v1313, 4
        %1319 = vst [vmem:[#allocation5] sm:$0xe] %v1311
        %1320 = vst [vmem:[#allocation5 + $0x4] sm:$0xf] %v1314
        %1321 = vst [vmem:[#allocation5 + $0x8] sm:$0x1] %v1315
        %v1322 = vld [vmem:[#allocation5] sm:$0xf]
        %v1323 = vld [vmem:[#allocation5 + $0x4] sm:$0xf]
        %v1324 = vld [vmem:[#allocation5] sm:$0xe]
        %v1325 = vld [vmem:[#allocation5 + $0x8] sm:$0x1]
        %v1328 = vunpack.c.l.b16 %v1322
        %v1329 = vunpack.c.l.b16 %v1323
        %v1330 = vpack.c.b16 %v1329, %v1328
        %v1334 = vunpack.c.l.b16 %v1324
        %v1335 = vunpack.c.l.b16 %v1325
        %v1336 = vpack.c.b16 %v1329, %v1334
        %v1337 = vpack.c.b16 %v1335, %v1335
        %v1338 = vrot.slane %v1336, 1
        %v1339 = vrot.slane %v1337, 1
        %v1340 = vsel %vm1122, %v1338, %v1339
        %v1342 = vld [vmem:[#allocation13] sm:$0xf]
        %v1343 = vld [vmem:[#allocation13 + $0x4] sm:$0xf]
        %v1344 = vld [vmem:[#allocation13 + $0x8] sm:$0xf]
        %v1345 = vld [vmem:[#allocation13 + $0xc] sm:$0xf]
        %v1346 = vld [vmem:[#allocation13 + $0x10] sm:$0xf]
        %v1347 = vld [vmem:[#allocation13 + $0x14] sm:$0xf]
        %v1348 = vld [vmem:[#allocation13 + $0x18] sm:$0xf]
        %v1349 = vld [vmem:[#allocation13 + $0x1c] sm:$0xf]
        %v1350 = vld [vmem:[#allocation13 + $0x20] sm:$0xf]
        %v1351 = vld [vmem:[#allocation13 + $0x24] sm:$0xf]
        %v1352 = vld [vmem:[#allocation13 + $0x28] sm:$0xf]
        %v1353 = vld [vmem:[#allocation13 + $0x2c] sm:$0xf]
        %v1354 = vld [vmem:[#allocation13 + $0x30] sm:$0xf]
        %v1355 = vld [vmem:[#allocation13 + $0x34] sm:$0xf]
        %v1356 = vld [vmem:[#allocation13 + $0x38] sm:$0xf]
        %v1357 = vld [vmem:[#allocation13 + $0x3c] sm:$0xf]
        %v1358 = vld [vmem:[#allocation13 + $0x40] sm:$0xf]
        %v1359 = vld [vmem:[#allocation13 + $0x44] sm:$0xf]
        %v1360 = vld [vmem:[#allocation13 + $0x48] sm:$0xf]
        %v1361 = vld [vmem:[#allocation13 + $0x4c] sm:$0xf]
        %v1362 = vld [vmem:[#allocation13 + $0x50] sm:$0xf]
        %v1363 = vld [vmem:[#allocation13 + $0x54] sm:$0xf]
        %v1364 = vld [vmem:[#allocation13 + $0x58] sm:$0xf]
        %v1365 = vld [vmem:[#allocation13 + $0x5c] sm:$0xf]
        %v1366 = vld [vmem:[#allocation13 + $0x60] sm:$0xf]
        %v1367 = vld [vmem:[#allocation13 + $0x64] sm:$0xf]
        %v1368 = vld [vmem:[#allocation13 + $0x68] sm:$0xf]
        %v1369 = vld [vmem:[#allocation13 + $0x6c] sm:$0xf]
        %v1370 = vld [vmem:[#allocation13 + $0x70] sm:$0xf]
        %v1371 = vld [vmem:[#allocation13 + $0x74] sm:$0xf]
        %v1372 = vld [vmem:[#allocation13 + $0x78] sm:$0xf]
        %v1373 = vld [vmem:[#allocation13 + $0x7c] sm:$0xf]
        %v1374 = vld [vmem:[%s10] sm:$0x1]
        %v1376 = vlaneseq
        %v1377 = vshrl.u32 %v1376, 7
        %v1378 = vsub.s32 0, %v1377
        %v1379 = vrot.slane %v1374, %v1378
        %v1413 = vunpack.c.l.b16 %v1342
        %v1414 = vunpack.c.l.b16 %v1343
        %v1415 = vunpack.c.l.b16 %v1344
        %v1416 = vunpack.c.l.b16 %v1345
        %v1417 = vunpack.c.l.b16 %v1346
        %v1418 = vunpack.c.l.b16 %v1347
        %v1419 = vunpack.c.l.b16 %v1348
        %v1420 = vunpack.c.l.b16 %v1349
        %v1421 = vunpack.c.l.b16 %v1350
        %v1422 = vunpack.c.l.b16 %v1351
        %v1423 = vunpack.c.l.b16 %v1352
        %v1424 = vunpack.c.l.b16 %v1353
        %v1425 = vunpack.c.l.b16 %v1354
        %v1426 = vunpack.c.l.b16 %v1355
        %v1427 = vunpack.c.l.b16 %v1356
        %v1428 = vunpack.c.l.b16 %v1357
        %v1429 = vunpack.c.l.b16 %v1358
        %v1430 = vunpack.c.l.b16 %v1359
        %v1431 = vunpack.c.l.b16 %v1360
        %v1432 = vunpack.c.l.b16 %v1361
        %v1433 = vunpack.c.l.b16 %v1362
        %v1434 = vunpack.c.l.b16 %v1363
        %v1435 = vunpack.c.l.b16 %v1364
        %v1436 = vunpack.c.l.b16 %v1365
        %v1437 = vunpack.c.l.b16 %v1366
        %v1438 = vunpack.c.l.b16 %v1367
        %v1439 = vunpack.c.l.b16 %v1368
        %v1440 = vunpack.c.l.b16 %v1369
        %v1441 = vunpack.c.l.b16 %v1370
        %v1442 = vunpack.c.l.b16 %v1371
        %v1443 = vunpack.c.l.b16 %v1372
        %v1444 = vunpack.c.l.b16 %v1373
        %v1445 = vpack.c.b16 %v1414, %v1413
        %v1446 = vpack.c.b16 %v1416, %v1415
        %v1447 = vpack.c.b16 %v1418, %v1417
        %v1448 = vpack.c.b16 %v1420, %v1419
        %v1449 = vpack.c.b16 %v1422, %v1421
        %v1450 = vpack.c.b16 %v1424, %v1423
        %v1451 = vpack.c.b16 %v1426, %v1425
        %v1452 = vpack.c.b16 %v1428, %v1427
        %v1453 = vpack.c.b16 %v1430, %v1429
        %v1454 = vpack.c.b16 %v1432, %v1431
        %v1455 = vpack.c.b16 %v1434, %v1433
        %v1456 = vpack.c.b16 %v1436, %v1435
        %v1457 = vpack.c.b16 %v1438, %v1437
        %v1458 = vpack.c.b16 %v1440, %v1439
        %v1459 = vpack.c.b16 %v1442, %v1441
        %v1460 = vpack.c.b16 %v1444, %v1443
        %1477 = vmatprep.subr.bf16.mxu0 0
        %1478 = vmatpush1.bf16.msra.mxu0 %v1445
        %1479 = vmatprep.subr.bf16.mxu0 0
        %1480 = vmatpush1.bf16.msra.mxu0 %v1446
        %1481 = vmatprep.subr.bf16.mxu0 0
        %1482 = vmatpush1.bf16.msra.mxu0 %v1447
        %1483 = vmatprep.subr.bf16.mxu0 0
        %1484 = vmatpush1.bf16.msra.mxu0 %v1448
        %1485 = vmatprep.subr.bf16.mxu0 0
        %1486 = vmatpush1.bf16.msra.mxu0 %v1449
        %1487 = vmatprep.subr.bf16.mxu0 0
        %1488 = vmatpush1.bf16.msra.mxu0 %v1450
        %1489 = vmatprep.subr.bf16.mxu0 0
        %1490 = vmatpush1.bf16.msra.mxu0 %v1451
        %1491 = vmatprep.subr.bf16.mxu0 0
        %1492 = vmatpush1.bf16.msra.mxu0 %v1452
        %1493 = vmatprep.subr.bf16.mxu0 0
        %1494 = vmatpush1.bf16.msra.mxu0 %v1453
        %1495 = vmatprep.subr.bf16.mxu0 0
        %1496 = vmatpush1.bf16.msra.mxu0 %v1454
        %1497 = vmatprep.subr.bf16.mxu0 0
        %1498 = vmatpush1.bf16.msra.mxu0 %v1455
        %1499 = vmatprep.subr.bf16.mxu0 0
        %1500 = vmatpush1.bf16.msra.mxu0 %v1456
        %1501 = vmatprep.subr.bf16.mxu0 0
        %1502 = vmatpush1.bf16.msra.mxu0 %v1457
        %1503 = vmatprep.subr.bf16.mxu0 0
        %1504 = vmatpush1.bf16.msra.mxu0 %v1458
        %1505 = vmatprep.subr.bf16.mxu0 0
        %1506 = vmatpush1.bf16.msra.mxu0 %v1459
        %1507 = vmatprep.subr.bf16.mxu0 0
        %1508 = vmatpush1.bf16.msra.mxu0 %v1460
        %1509 = vmatprep.mubr.bf16.mxu0 %v1340
        %1510 = vmatmul.mubr.bf16.gmra.mrb[0].mxu0 %v1330
        %v1511 = vpop.f32.mrb[0].mxu0
        %v1512 = vadd.f32 %v1379, %v1511
        %v1513 = vpop.f32.mrb[0].mxu0
        %v1514 = vpop.f32.mrb[0].mxu0
        %v1515 = vadd.f32 %v1379, %v1514
        %v1516 = vpop.f32.mrb[0].mxu0
        %1517 = vdwg.mxu0
        %v1518 = vmax.f32 %v1512, 0.0
        %v1519 = vmax.f32 %v1515, 0.0
        %v1520 = vunpack.c.l.bf16 %v1087
        %v1521 = vunpack.c.h.bf16 %v1087
        %v1522 = vadd.f32 %v1518, %v1520
        %v1523 = vadd.f32 %v1519, %v1521
        %v1524 = vmax.f32 %v1522, 0.0
        %v1525 = vmax.f32 %v1523, 0.0
        %v1526 = vld [vmem:[#allocation6] sm:$0x1]
        %v1527 = vadd.f32 %v1524, %v1525
        %v1528 = vrot.slane %v1527, 4
        %v1529 = vadd.f32 %v1527, %v1528
        %v1530 = vrot.slane %v1529, 2
        %v1531 = vadd.f32 %v1529, %v1530
        %v1532 = vrot.slane %v1531, 1
        %v1533 = vadd.f32 %v1531, %v1532
        %v1534 = vadd.f32 %v1526, %v1533
        %1535 = vst [vmem:[#allocation6] sm:$0x1] %v1534
        // Predicated region
        $region85: #{tcn_forward_pallas.1} parent=63 // pred_check
          %p1536 = pneg %p472
        $region86: #{tcn_forward_pallas.1} parent=63 // pred_check_branch
          %1538 = sbr.rel (%p1536) target = $region88
        $region87: #{tcn_forward_pallas.1} parent=63 // pred_region
          %v1539 = vld [vmem:[#allocation6] sm:$0x1]
          %v1540 = vmul.f32 %v1539, 0.0625
          %1541 = vst [vmem:[%s460] sm:$0x1] %v1540
        $region88: #{tcn_forward_pallas.1} parent=63 // pred_fallthru
          _
        %s1542 = sand.u32 %s286, 1
        %s1543 = scalar_lea.sflag [#allocation9], %s1542
        %s1544 = sand.u32 %s286, 1
        %s1545 = scalar_lea.vmem [#allocation15], %s1544
        // Predicated region
        $region89: #{tcn_forward_pallas.1} parent=63 // pred_check
          %p1546 = pneg %p296
        $region90: #{tcn_forward_pallas.1} parent=63 // pred_check_branch
          %1548 = sbr.rel (%p1546) target = $region92
        $region91: #{tcn_forward_pallas.1} parent=63 // pred_region
          %s1550 = ssub.s32 16, 16
          %1551 = vsyncadd %s1543, %s1550
          %s1552 = smul.addr %s32, 16
          %s1553 = scalar_lea.hbm %s11, %s1552
          %s1555 = sshll.u32 %s1545, 4
          %s1556 = int_to_ptr.vmem [resolvable:$true] %s1555
          %1558 = dma.vmem_to_hbm [thread:$0]  %s1556, 16, %s1553, %s1543
        $region92: #{tcn_forward_pallas.1} parent=63 // pred_fallthru
          _
      $region64: #{tcn_forward_pallas.1} parent=5 // pred_fallthru
        _
      %p1559 = scmp.le.s32.totalorder 2, %s23
      // Predicated region
      $region93: #{tcn_forward_pallas.1} parent=5 // pred_check
        %p1560 = pneg %p1559
      $region94: #{tcn_forward_pallas.1} parent=5 // pred_check_branch
        %1562 = sbr.rel (%p1560) target = $region96
      $region95: #{tcn_forward_pallas.1} parent=5 // pred_region
        %s1563 = ssub.s32 %s23, 2
        // Predicated region
        $region97: #{tcn_forward_pallas.1} parent=95 // pred_check
          %p1564 = pneg %p302
        $region98: #{tcn_forward_pallas.1} parent=95 // pred_check_branch
          %1566 = sbr.rel (%p1564) target = $region100
        $region99: #{tcn_forward_pallas.1} parent=95 // pred_region
          %s1567 = sand.u32 %s287, 1
          %s1568 = scalar_lea.sflag [#allocation9], %s1567
          %s1569 = sand.u32 %s287, 1
          %s1570 = scalar_lea.vmem [#allocation15], %s1569
          %1571 = dma.done %s1568, 16
        $region100: #{tcn_forward_pallas.1} parent=95 // pred_fallthru
          _
      $region96: #{tcn_forward_pallas.1} parent=5 // pred_fallthru
        _
    $region6: #{tcn_forward_pallas.1} parent=1 // loop_footer
      %s27 = sadd.s32 1, %s23
    $region7: #{tcn_forward_pallas.1} parent=1 // loop_footer_branch
      %22 = sbr.rel target = $region3
    $region8: #{tcn_forward_pallas.1} parent=1 // loop_exit
      _
    %1572 = vsyncpa [#allocation8], 1
    %s1573 = scalar_lea.sflag [#allocation8], 1
    %1574 = vsyncpa %s1573, 1
    %1575 = vsyncpa [#allocation11], 1
    %1576 = vsyncpa [#allocation14], 1
    %1577 = vsyncpa [#allocation9], 1
    %s1578 = scalar_lea.sflag [#allocation9], 1
    %1579 = vsyncpa %s1578, 1

</llo_original>
